<compile_context>
chip_gen: v7x
topology: tpu7x:2x2x1
jax: 0.10.0
libtpu: 0.0.40
codegen_flags: <defaults>
</compile_context>

<pallas_src>
import functools

import numpy as np
import jax
import jax.numpy as jnp
from jax.experimental import pallas as pl
from jax.experimental.pallas import tpu as pltpu


# ---------------------------------------------------------------------------
# Static (trace-time) helpers mirroring the PyTorch module
# ---------------------------------------------------------------------------
def _init_window_size(idx, img_size, split_size, window_size):
    if idx == 0:
        D_sp = window_size if img_size[0] > window_size else img_size[0]
        H_sp = window_size if img_size[1] > window_size else img_size[1]
        W_sp = window_size if img_size[2] > window_size else img_size[2]
        D_sf = D_sp // 2 if img_size[0] > D_sp else 0
        H_sf = H_sp // 2 if img_size[1] > H_sp else 0
        W_sf = W_sp // 2 if img_size[2] > W_sp else 0
    elif idx == 1:
        D_sp = split_size if img_size[0] > split_size else img_size[0]
        H_sp = img_size[1]
        W_sp = split_size if img_size[2] > split_size else img_size[2]
        D_sf = D_sp // 2 if img_size[0] > D_sp else 0
        H_sf = 0
        W_sf = W_sp // 2 if img_size[2] > W_sp else 0
    elif idx == 2:
        D_sp = split_size if img_size[0] > split_size else img_size[0]
        H_sp = split_size if img_size[1] > split_size else img_size[1]
        W_sp = img_size[2]
        D_sf = D_sp // 2 if img_size[0] > D_sp else 0
        H_sf = H_sp // 2 if img_size[1] > H_sp else 0
        W_sf = 0
    else:  # idx == 3
        D_sp = img_size[0]
        H_sp = split_size if img_size[1] > split_size else img_size[1]
        W_sp = split_size if img_size[2] > split_size else img_size[2]
        D_sf = 0
        H_sf = H_sp // 2 if img_size[1] > H_sp else 0
        W_sf = W_sp // 2 if img_size[2] > W_sp else 0
    return (D_sp, H_sp, W_sp), (D_sf, H_sf, W_sf)


def _relative_position_index(D_sp, H_sp, W_sp):
    coords = np.stack(
        np.meshgrid(np.arange(D_sp), np.arange(H_sp), np.arange(W_sp), indexing="ij")
    )
    coords_flatten = coords.reshape(3, -1)
    rel = coords_flatten[:, :, None] - coords_flatten[:, None, :]
    rel = rel.transpose(1, 2, 0).copy()
    rel[:, :, 0] += D_sp - 1
    rel[:, :, 1] += H_sp - 1
    rel[:, :, 2] += W_sp - 1
    rel[:, :, 0] *= (2 * H_sp - 1) * (2 * W_sp - 1)
    rel[:, :, 1] *= 2 * W_sp - 1
    return rel.sum(-1)  # (n, n) int


def _compute_attn_mask(dims, window_size, shift_size):
    """Replicates compute_mask(); all-static, evaluated with numpy at trace time."""
    d, h, w = dims
    D_sp, H_sp, W_sp = window_size
    img_mask = np.zeros((1, d, h, w, 1), np.float32)
    cnt = 0
    for ds in (slice(-D_sp), slice(-D_sp, -shift_size[0]), slice(-shift_size[0], None)):
        for hs in (slice(-H_sp), slice(-H_sp, -shift_size[1]), slice(-shift_size[1], None)):
            for ws in (slice(-W_sp), slice(-W_sp, -shift_size[2]), slice(-shift_size[2], None)):
                img_mask[:, ds, hs, ws, :] = cnt
                cnt += 1
    mw = img_mask.reshape(1, d // D_sp, D_sp, h // H_sp, H_sp, w // W_sp, W_sp, 1)
    mw = mw.transpose(0, 1, 3, 5, 2, 4, 6, 7).reshape(-1, D_sp * H_sp * W_sp)
    attn_mask = mw[:, None, :] - mw[:, :, None]
    attn_mask = np.where(attn_mask != 0, np.float32(-100.0), np.float32(0.0))
    return attn_mask.astype(np.float32)  # (nw, n, n)


# ---------------------------------------------------------------------------
# Pallas kernel: fused windowed attention (all heads of one window per step)
# ---------------------------------------------------------------------------
def _window_attn_kernel(q_ref, k_ref, v_ref, bias_ref, mask_ref, o_ref, *, scale):
    # q/k/v : (num_head, n, head_dim) bf16 ; bias : (num_head, n, n) f32
    # mask  : (n, n) f32 ; o : (num_head, n, head_dim) f32
    attn = jnp.einsum(
        "hnd,hmd->hnm", q_ref[...], k_ref[...], preferred_element_type=jnp.float32
    )
    attn = attn * scale + bias_ref[...] + mask_ref[...][None, :, :]
    # numerically-stable softmax in f32
    attn = attn - jnp.max(attn, axis=-1, keepdims=True)
    p = jnp.exp(attn)
    denom = jnp.sum(p, axis=-1, keepdims=True)
    p = p * pl.reciprocal(denom, approx=True)
    # attn_drop(rate=0.0) is the identity.
    out = jnp.einsum(
        "hnm,hmd->hnd", p.astype(v_ref.dtype), v_ref[...],
        preferred_element_type=jnp.float32,
    )
    o_ref[...] = out.astype(o_ref.dtype)


def _window_attention_pallas(q, k, v, bias, mask, *, scale):
    B, nw, H, n, hd = q.shape
    mask_nw = mask.shape[0]
    mask_idx = (lambda b, w: (w, 0, 0)) if mask_nw > 1 else (lambda b, w: (0, 0, 0))
    qkv_spec = pl.BlockSpec(
        (pl.Squeezed(), pl.Squeezed(), H, n, hd), lambda b, w: (b, w, 0, 0, 0)
    )
    kern = functools.partial(_window_attn_kernel, scale=scale)
    return pl.pallas_call(
        kern,
        grid=(B, nw),
        out_shape=jax.ShapeDtypeStruct((B, nw, H, n, hd), jnp.float32),
        in_specs=[
            qkv_spec,
            qkv_spec,
            qkv_spec,
            pl.BlockSpec((H, n, n), lambda b, w: (0, 0, 0)),
            pl.BlockSpec((pl.Squeezed(), n, n), mask_idx),
        ],
        out_specs=pl.BlockSpec(
            (pl.Squeezed(), pl.Squeezed(), H, n, hd), lambda b, w: (b, w, 0, 0, 0)
        ),
        compiler_params=pltpu.CompilerParams(
            dimension_semantics=("parallel", "parallel")
        ),
    )(q, k, v, bias, mask)


def _window_attention_ref(q, k, v, bias, mask, *, scale):
    # pure-JAX reference on the same (bf16-quantized) inputs
    qf = q.astype(jnp.float32)
    kf = k.astype(jnp.float32)
    vf = v.astype(jnp.float32)
    attn = jnp.einsum("bwhnd,bwhmd->bwhnm", qf, kf) * scale
    attn = attn + bias[None, None] + mask[None, :, None]
    attn = jax.nn.softmax(attn, axis=-1)
    return jnp.einsum("bwhnm,bwhmd->bwhnd", attn, vf)


# ---------------------------------------------------------------------------
# Full VariableShapeAttention forward
# ---------------------------------------------------------------------------
def variable_shape_attention(qkv, bias_table, *, num_head, img_size, idx,
                             split_size, window_size, shift, use_pallas=True):
    B, D, H, W, C = qkv.shape
    Cdim = C // 3
    head_dim = Cdim // num_head
    scale = float(head_dim) ** -0.5

    (D_sp, H_sp, W_sp), (D_sf, H_sf, W_sf) = _init_window_size(
        idx, img_size, split_size, window_size
    )
    n = D_sp * H_sp * W_sp

    pad_d1 = (D_sp - D % D_sp) % D_sp
    pad_b = (H_sp - H % H_sp) % H_sp
    pad_r = (W_sp - W % W_sp) % W_sp
    x = jnp.pad(qkv, ((0, 0), (0, pad_d1), (0, pad_b), (0, pad_r), (0, 0)))
    Dp, Hp, Wp = D + pad_d1, H + pad_b, W + pad_r
    if shift:
        x = jnp.roll(x, shift=(-D_sf, -H_sf, -W_sf), axis=(1, 2, 3))

    nD, nH, nW = Dp // D_sp, Hp // H_sp, Wp // W_sp
    nw = nD * nH * nW

    # window_partition for q/k/v with the module's interleaved head split:
    # C splits as (3, head_dim, num_head), head index fastest.
    x = x.reshape(B, nD, D_sp, nH, H_sp, nW, W_sp, 3, head_dim, num_head)
    x = jnp.transpose(x, (7, 0, 1, 3, 5, 9, 2, 4, 6, 8))
    x = x.reshape(3, B, nw, num_head, n, head_dim)
    q = x[0].astype(jnp.bfloat16)   # bf16 MXU inputs, f32 accumulation
    k = x[1].astype(jnp.bfloat16)
    v = x[2].astype(jnp.bfloat16)

    # relative position bias (num_head, n, n)
    rel_idx = _relative_position_index(D_sp, H_sp, W_sp)
    bias = bias_table[jnp.asarray(rel_idx.reshape(-1), jnp.int32)]
    bias = bias.reshape(n, n, num_head)
    bias = jnp.transpose(bias, (2, 0, 1)).astype(jnp.float32)

    # shift mask (nw, n, n) or a single zero window
    if shift:
        mask = jnp.asarray(
            _compute_attn_mask((Dp, Hp, Wp), (D_sp, H_sp, W_sp), (D_sf, H_sf, W_sf))
        )
    else:
        mask = jnp.zeros((1, n, n), jnp.float32)

    if use_pallas:
        out = _window_attention_pallas(q, k, v, bias, mask, scale=scale)
    else:
        out = _window_attention_ref(q, k, v, bias, mask, scale=scale)
    # out: (B, nw, num_head, n, head_dim) f32

    # merge heads exactly like the module: channel = dim * num_head + head
    out = jnp.transpose(out, (0, 1, 3, 4, 2)).reshape(B, nw, n, Cdim)

    # window_reverse
    out = out.reshape(B, nD, nH, nW, D_sp, H_sp, W_sp, Cdim)
    out = jnp.transpose(out, (0, 1, 4, 2, 5, 3, 6, 7)).reshape(B, Dp, Hp, Wp, Cdim)

    if shift:
        out = jnp.roll(out, shift=(D_sf, H_sf, W_sf), axis=(1, 2, 3))
    out = out[:, :D, :H, :W, :]
    return out


# ---------------------------------------------------------------------------
if __name__ == "__main__":
    # VariableShapeAttention(feature_size=16, idx=1, split_size=4, window_size=4,
    #                        num_head=4, img_size=(8, 8, 10), shift=True)
    feature_size = 16
    num_head = 4
    idx = 1
    split_size = 4
    window_size = 4
    img_size = (8, 8, 10)          # W=10 exercises the pad + crop path
    shift = True                   # exercises roll + attention-mask path
    B = 2
    Cdim = 4 * feature_size        # 64
    C = 3 * Cdim                   # 192  (packed q,k,v)

    key = jax.random.PRNGKey(0)
    k_qkv, k_tab = jax.random.split(key)
    qkv = jax.random.normal(k_qkv, (B,) + img_size + (C,), jnp.float32)

    (D_sp, H_sp, W_sp), _ = _init_window_size(idx, img_size, split_size, window_size)
    num_rel = (2 * D_sp - 1) * (2 * H_sp - 1) * (2 * W_sp - 1)
    bias_table = 0.02 * jax.random.truncated_normal(
        k_tab, -2.0, 2.0, (num_rel, num_head), jnp.float32
    )

    common = dict(num_head=num_head, img_size=img_size, idx=idx,
                  split_size=split_size, window_size=window_size, shift=shift)
    fwd = jax.jit(functools.partial(variable_shape_attention, use_pallas=True, **common))
    out = jax.block_until_ready(fwd(qkv, bias_table))

    assert out.shape == (B,) + img_size + (Cdim,), out.shape
    assert bool(jnp.all(jnp.isfinite(out)))

    # sanity check vs. a pure-JAX reference on the same bf16-quantized q/k/v
    ref_fwd = jax.jit(functools.partial(variable_shape_attention, use_pallas=False, **common))
    ref = jax.block_until_ready(ref_fwd(qkv, bias_table))
    max_err = float(jnp.max(jnp.abs(out - ref)))
    assert max_err < 2e-2, max_err

    print("KERNEL_OK")
</pallas_src>

<mosaic_0001>
module attributes {stable_mosaic.version = 11 : i64} {
  func.func @_window_attn_kernel(%arg0: i32, %arg1: i32, %arg2: memref<1x1x4x128x16xbf16, #tpu.memory_space<vmem>>, %arg3: memref<1x1x4x128x16xbf16, #tpu.memory_space<vmem>>, %arg4: memref<1x1x4x128x16xbf16, #tpu.memory_space<vmem>>, %arg5: memref<4x128x128xf32, #tpu.memory_space<vmem>>, %arg6: memref<1x128x128xf32, #tpu.memory_space<vmem>>, %arg7: memref<1x1x4x128x16xf32, #tpu.memory_space<vmem>>) attributes {dimension_semantics = [#tpu.dimension_semantics<parallel>, #tpu.dimension_semantics<parallel>], iteration_bounds = array<i64: 2, 6>, scalar_prefetch = 0 : i64, scratch_operands = 0 : i64, tpu.core_type = #tpu.core_type<tc>, window_params = [{transform_indices = @transform_0, window_bounds = array<i64: 1, 1, 4, 128, 16>}, {transform_indices = @transform_1, window_bounds = array<i64: 1, 1, 4, 128, 16>}, {transform_indices = @transform_2, window_bounds = array<i64: 1, 1, 4, 128, 16>}, {pipeline_mode = #tpu.pipeline_mode<synchronous>, transform_indices = @transform_3, window_bounds = array<i64: 4, 128, 128>}, {transform_indices = @transform_4, window_bounds = array<i64: 1, 128, 128>}, {transform_indices = @transform_5, window_bounds = array<i64: 1, 1, 4, 128, 16>}]} {
    %c0 = arith.constant 0 : index
    %c0_0 = arith.constant 0 : index
    %c0_1 = arith.constant 0 : index
    %c0_2 = arith.constant 0 : index
    %c0_3 = arith.constant 0 : index
    %0 = vector.load %arg2[%c0, %c0_0, %c0_1, %c0_2, %c0_3] : memref<1x1x4x128x16xbf16, #tpu.memory_space<vmem>>, vector<1x1x4x128x16xbf16>
    %1 = vector.shape_cast %0 : vector<1x1x4x128x16xbf16> to vector<4x128x16xbf16>
    %c0_4 = arith.constant 0 : index
    %c0_5 = arith.constant 0 : index
    %c0_6 = arith.constant 0 : index
    %c0_7 = arith.constant 0 : index
    %c0_8 = arith.constant 0 : index
    %2 = vector.load %arg3[%c0_4, %c0_5, %c0_6, %c0_7, %c0_8] : memref<1x1x4x128x16xbf16, #tpu.memory_space<vmem>>, vector<1x1x4x128x16xbf16>
    %3 = vector.shape_cast %2 : vector<1x1x4x128x16xbf16> to vector<4x128x16xbf16>
    "tpu.trace_start"() <{level = 10 : i32, message = "hnd,hmd->hnm"}> : () -> ()
    %cst = arith.constant dense<0.000000e+00> : vector<4x128x128xf32>
    %4 = tpu.matmul %1, %3, %cst {dimension_numbers = #tpu.dot_dimension_numbers<[2], [2], [1], [1], [0, 0, 0, 1, 1, 1], [0], [0]>} : vector<4x128x16xbf16>, vector<4x128x16xbf16>, vector<4x128x128xf32> -> vector<4x128x128xf32>
    "tpu.trace_stop"() : () -> ()
    %cst_9 = arith.constant 2.500000e-01 : f32
    %5 = vector.broadcast %cst_9 : f32 to vector<4x128x128xf32>
    %6 = arith.mulf %4, %5 : vector<4x128x128xf32>
    %c0_10 = arith.constant 0 : index
    %c0_11 = arith.constant 0 : index
    %c0_12 = arith.constant 0 : index
    %7 = vector.load %arg5[%c0_10, %c0_11, %c0_12] : memref<4x128x128xf32, #tpu.memory_space<vmem>>, vector<4x128x128xf32>
    %8 = arith.addf %6, %7 : vector<4x128x128xf32>
    %c0_13 = arith.constant 0 : index
    %c0_14 = arith.constant 0 : index
    %c0_15 = arith.constant 0 : index
    %9 = vector.load %arg6[%c0_13, %c0_14, %c0_15] : memref<1x128x128xf32, #tpu.memory_space<vmem>>, vector<1x128x128xf32>
    %10 = vector.shape_cast %9 : vector<1x128x128xf32> to vector<128x128xf32>
    %11 = vector.shape_cast %10 : vector<128x128xf32> to vector<1x128x128xf32>
    %12 = vector.broadcast %11 : vector<1x128x128xf32> to vector<4x128x128xf32>
    %13 = arith.addf %8, %12 : vector<4x128x128xf32>
    %cst_16 = arith.constant dense<0xFF800000> : vector<4x128xf32>
    %14 = vector.multi_reduction <maximumf>, %13, %cst_16 [2] : vector<4x128x128xf32> to vector<4x128xf32>
    %15 = vector.shape_cast %14 : vector<4x128xf32> to vector<4x128x1xf32>
    %16 = vector.broadcast %15 : vector<4x128x1xf32> to vector<4x128x128xf32>
    %17 = arith.subf %13, %16 : vector<4x128x128xf32>
    %18 = math.exp %17 : vector<4x128x128xf32>
    %cst_17 = arith.constant dense<0.000000e+00> : vector<4x128xf32>
    %19 = vector.multi_reduction <add>, %18, %cst_17 [2] : vector<4x128x128xf32> to vector<4x128xf32>
    %20 = vector.shape_cast %19 : vector<4x128xf32> to vector<4x128x1xf32>
    %21 = tpu.reciprocal %20 {approx = true} : vector<4x128x1xf32> -> vector<4x128x1xf32>
    %22 = vector.broadcast %21 : vector<4x128x1xf32> to vector<4x128x128xf32>
    %23 = arith.mulf %18, %22 : vector<4x128x128xf32>
    %24 = arith.truncf %23 : vector<4x128x128xf32> to vector<4x128x128xbf16>
    %c0_18 = arith.constant 0 : index
    %c0_19 = arith.constant 0 : index
    %c0_20 = arith.constant 0 : index
    %c0_21 = arith.constant 0 : index
    %c0_22 = arith.constant 0 : index
    %25 = vector.load %arg4[%c0_18, %c0_19, %c0_20, %c0_21, %c0_22] : memref<1x1x4x128x16xbf16, #tpu.memory_space<vmem>>, vector<1x1x4x128x16xbf16>
    %26 = vector.shape_cast %25 : vector<1x1x4x128x16xbf16> to vector<4x128x16xbf16>
    "tpu.trace_start"() <{level = 10 : i32, message = "hnm,hmd->hnd"}> : () -> ()
    %cst_23 = arith.constant dense<0.000000e+00> : vector<4x128x16xf32>
    %27 = tpu.matmul %24, %26, %cst_23 {dimension_numbers = #tpu.dot_dimension_numbers<[2], [1], [1], [2], [0, 0, 0, 1, 1, 2], [0], [0]>} : vector<4x128x128xbf16>, vector<4x128x16xbf16>, vector<4x128x16xf32> -> vector<4x128x16xf32>
    "tpu.trace_stop"() : () -> ()
    %c0_24 = arith.constant 0 : index
    %c0_25 = arith.constant 0 : index
    %c0_26 = arith.constant 0 : index
    %c0_27 = arith.constant 0 : index
    %c0_28 = arith.constant 0 : index
    %28 = vector.load %arg7[%c0_24, %c0_25, %c0_26, %c0_27, %c0_28] : memref<1x1x4x128x16xf32, #tpu.memory_space<vmem>>, vector<1x1x4x128x16xf32>
    %29 = vector.shape_cast %28 : vector<1x1x4x128x16xf32> to vector<4x128x16xf32>
    %30 = vector.shape_cast %27 : vector<4x128x16xf32> to vector<1x1x4x128x16xf32>
    tpu.vector_store %arg7[%c0_24, %c0_25, %c0_26, %c0_27, %c0_28], %30 {strides = array<i32>} : memref<1x1x4x128x16xf32, #tpu.memory_space<vmem>>, vector<1x1x4x128x16xf32>,
    return
  }
  func.func @transform_0(%arg0: i32, %arg1: i32) -> (i32, i32, i32, i32, i32) {
    %c0_i32 = arith.constant 0 : i32
    %c0_i32_0 = arith.constant 0 : i32
    %c0_i32_1 = arith.constant 0 : i32
    %c0_i32_2 = arith.constant 0 : i32
    return %arg0, %arg1, %c0_i32, %c0_i32_0, %c0_i32_1 : i32, i32, i32, i32, i32
  }
  func.func @transform_1(%arg0: i32, %arg1: i32) -> (i32, i32, i32, i32, i32) {
    %c0_i32 = arith.constant 0 : i32
    %c0_i32_0 = arith.constant 0 : i32
    %c0_i32_1 = arith.constant 0 : i32
    %c0_i32_2 = arith.constant 0 : i32
    return %arg0, %arg1, %c0_i32, %c0_i32_0, %c0_i32_1 : i32, i32, i32, i32, i32
  }
  func.func @transform_2(%arg0: i32, %arg1: i32) -> (i32, i32, i32, i32, i32) {
    %c0_i32 = arith.constant 0 : i32
    %c0_i32_0 = arith.constant 0 : i32
    %c0_i32_1 = arith.constant 0 : i32
    %c0_i32_2 = arith.constant 0 : i32
    return %arg0, %arg1, %c0_i32, %c0_i32_0, %c0_i32_1 : i32, i32, i32, i32, i32
  }
  func.func @transform_3(%arg0: i32, %arg1: i32) -> (i32, i32, i32) {
    %c0_i32 = arith.constant 0 : i32
    %c0_i32_0 = arith.constant 0 : i32
    %c0_i32_1 = arith.constant 0 : i32
    %c0_i32_2 = arith.constant 0 : i32
    return %c0_i32, %c0_i32_0, %c0_i32_1 : i32, i32, i32
  }
  func.func @transform_4(%arg0: i32, %arg1: i32) -> (i32, i32, i32) {
    %c0_i32 = arith.constant 0 : i32
    %c0_i32_0 = arith.constant 0 : i32
    %c0_i32_1 = arith.constant 0 : i32
    return %arg1, %c0_i32, %c0_i32_0 : i32, i32, i32
  }
  func.func @transform_5(%arg0: i32, %arg1: i32) -> (i32, i32, i32, i32, i32) {
    %c0_i32 = arith.constant 0 : i32
    %c0_i32_0 = arith.constant 0 : i32
    %c0_i32_1 = arith.constant 0 : i32
    %c0_i32_2 = arith.constant 0 : i32
    return %arg0, %arg1, %c0_i32, %c0_i32_0, %c0_i32_1 : i32, i32, i32, i32, i32
  }
}

</mosaic_0001>

<llo_original>
// kernel: variable_shape_attention.1
$region0: #{variable_shape_attention.1}
  #allocation0 [shape = 'u32[]', space=smem, size = 0x4, offset = 0x4, fixed_abs, tag = 'smem constant byte address 0x4 - core index']
  #allocation1 [shape = 'u32[144,128]{1,0:T(1,128)}', space=vmem, size = 0x12000, scoped, tag = 'internal scratch']
  %s0 = inlined_call_operand.vmem [shape: bf16[2,6,4,128,16], index: 0, kind: input, shape index: {}]
  %s1 = inlined_call_operand.vmem [shape: bf16[2,6,4,128,16], index: 1, kind: input, shape index: {}]
  %s2 = inlined_call_operand.vmem [shape: bf16[2,6,4,128,16], index: 2, kind: input, shape index: {}]
  %s3 = inlined_call_operand.vmem [shape: f32[4,128,128], index: 3, kind: input, shape index: {}]
  %s4 = inlined_call_operand.vmem [shape: f32[6,128,128], index: 4, kind: input, shape index: {}]
  %s5 = inlined_call_operand.vmem [shape: f32[2,6,4,128,16], index: 5, kind: output, shape index: {}]
  %s6 = sld [smem:[#allocation0]]
  $region53: #{variable_shape_attention.1} parent=0
    _
  %s8 = ssub.s32 1, %s6
  %s9 = scalar_select 0, %s8, %s6
  loop: start=0, step=1, limit=14
  $region2: #{variable_shape_attention.1} parent=0 // loop_pre_header
    _
  $region3: #{variable_shape_attention.1} parent=0 // loop_header
    %s11 = sphi 0, %s15
    %p12 = scmp.ge.s32.totalorder %s11, 14
    %s18 = sphi 0, %s30
    %s19 = sphi 0, %s26
    %s20 = sphi 0, %s18
    %s21 = sphi 0, %s19
    %s22 = sphi 0, %s20
    %s23 = sphi 0, %s21
    %s35 = sphi 0, %s37
    %s38 = sphi 0, %s35
    %s39 = sphi 0, %s38
    %s55 = sphi 0, %s39
    %s63 = sphi 0, %s65
    %s66 = sphi 0, %s63
    %s67 = sphi 0, %s66
    %s83 = sphi 0, %s67
    %s91 = sphi 0, %s93
    %s94 = sphi 0, %s91
    %s95 = sphi 0, %s94
    %s111 = sphi 0, %s95
    %s115 = sphi 0, %s115
    %s117 = sphi 0, %s115
    %s118 = sphi 0, %s117
    %s132 = sphi 0, %s118
    %s138 = sphi 0, %s140
    %s141 = sphi 0, %s138
    %s142 = sphi 0, %s141
    %s158 = sphi 0, %s142
    %s166 = sphi 0, %s168
    %s169 = sphi 0, %s166
    %s170 = sphi 0, %s169
    %s186 = sphi 0, %s170
  $region4: #{variable_shape_attention.1} parent=0 // loop_header_branch
    %14 = sbr.rel (%p12) target = $region8
  $region5: #{variable_shape_attention.1} parent=0 // loop_body
    %s16 = ssub.s32 %s11, 1
    %s17 = ssub.s32 %s11, 2
    %s24 = sadd.s32 1, %s19
    %p25 = scmp.ge.s32.totalorder %s24, 6
    %s26 = scalar_select %p25, 0, %s24
    %s27 = sadd.s32 1, %s18
    %s28 = scalar_select %p25, %s27, %s18
    %p29 = scmp.ge.s32.totalorder %s28, 2
    %s30 = scalar_select %p29, 0, %s28
    %s31 = ssub.s32 %s18, %s30
    %s32 = ssub.s32 %s19, %s26
    %s33 = sor.u32 %s31, %s32
    %p34 = scmp.eq.s32.totalorder %s33, 0
    %s36 = sadd.s32 %s35, 1
    %s37 = scalar_select %p34, %s35, %s36
    %p40 = pneg %p34
    %p41 = scmp.eq.s32.totalorder %s11, 11
    %p42 = por %p40, %p41
    %p43 = scmp.ne.s32.totalorder %s35, %s38
    %p44 = scmp.eq.s32.totalorder %s11, 0
    %p45 = por %p43, %p44
    %p46 = scmp.ne.s32.totalorder %s35, %s38
    %p47 = scmp.eq.s32.totalorder %s16, 11
    %p48 = por %p46, %p47
    %p49 = scmp.ne.s32.totalorder %s38, %s39
    %p50 = scmp.eq.s32.totalorder %s16, 0
    %p51 = por %p49, %p50
    %p52 = scmp.ne.s32.totalorder %s38, %s39
    %p53 = scmp.eq.s32.totalorder %s17, 11
    %p54 = por %p52, %p53
    %p56 = scmp.ne.s32.totalorder %s39, %s55
    %p57 = scmp.eq.s32.totalorder %s17, 0
    %p58 = por %p56, %p57
    %s59 = ssub.s32 %s18, %s30
    %s60 = ssub.s32 %s19, %s26
    %s61 = sor.u32 %s59, %s60
    %p62 = scmp.eq.s32.totalorder %s61, 0
    %s64 = sadd.s32 %s63, 1
    %s65 = scalar_select %p62, %s63, %s64
    %p68 = pneg %p62
    %p69 = scmp.eq.s32.totalorder %s11, 11
    %p70 = por %p68, %p69
    %p71 = scmp.ne.s32.totalorder %s63, %s66
    %p72 = scmp.eq.s32.totalorder %s11, 0
    %p73 = por %p71, %p72
    %p74 = scmp.ne.s32.totalorder %s63, %s66
    %p75 = scmp.eq.s32.totalorder %s16, 11
    %p76 = por %p74, %p75
    %p77 = scmp.ne.s32.totalorder %s66, %s67
    %p78 = scmp.eq.s32.totalorder %s16, 0
    %p79 = por %p77, %p78
    %p80 = scmp.ne.s32.totalorder %s66, %s67
    %p81 = scmp.eq.s32.totalorder %s17, 11
    %p82 = por %p80, %p81
    %p84 = scmp.ne.s32.totalorder %s67, %s83
    %p85 = scmp.eq.s32.totalorder %s17, 0
    %p86 = por %p84, %p85
    %s87 = ssub.s32 %s18, %s30
    %s88 = ssub.s32 %s19, %s26
    %s89 = sor.u32 %s87, %s88
    %p90 = scmp.eq.s32.totalorder %s89, 0
    %s92 = sadd.s32 %s91, 1
    %s93 = scalar_select %p90, %s91, %s92
    %p96 = pneg %p90
    %p97 = scmp.eq.s32.totalorder %s11, 11
    %p98 = por %p96, %p97
    %p99 = scmp.ne.s32.totalorder %s91, %s94
    %p100 = scmp.eq.s32.totalorder %s11, 0
    %p101 = por %p99, %p100
    %p102 = scmp.ne.s32.totalorder %s91, %s94
    %p103 = scmp.eq.s32.totalorder %s16, 11
    %p104 = por %p102, %p103
    %p105 = scmp.ne.s32.totalorder %s94, %s95
    %p106 = scmp.eq.s32.totalorder %s16, 0
    %p107 = por %p105, %p106
    %p108 = scmp.ne.s32.totalorder %s94, %s95
    %p109 = scmp.eq.s32.totalorder %s17, 11
    %p110 = por %p108, %p109
    %p112 = scmp.ne.s32.totalorder %s95, %s111
    %p113 = scmp.eq.s32.totalorder %s17, 0
    %p114 = por %p112, %p113
    %s116 = sadd.s32 %s115, 1
    %p119 = scmp.eq.s32.totalorder %s11, 11
    %p120 = scmp.ne.s32.totalorder %s115, %s117
    %p121 = scmp.eq.s32.totalorder %s11, 0
    %p122 = por %p120, %p121
    %p123 = scmp.ne.s32.totalorder %s115, %s117
    %p124 = scmp.eq.s32.totalorder %s16, 11
    %p125 = por %p123, %p124
    %p126 = scmp.ne.s32.totalorder %s117, %s118
    %p127 = scmp.eq.s32.totalorder %s16, 0
    %p128 = por %p126, %p127
    %p129 = scmp.ne.s32.totalorder %s117, %s118
    %p130 = scmp.eq.s32.totalorder %s17, 11
    %p131 = por %p129, %p130
    %p133 = scmp.ne.s32.totalorder %s118, %s132
    %p134 = scmp.eq.s32.totalorder %s17, 0
    %p135 = por %p133, %p134
    %s136 = ssub.s32 %s19, %s26
    %p137 = scmp.eq.s32.totalorder %s136, 0
    %s139 = sadd.s32 %s138, 1
    %s140 = scalar_select %p137, %s138, %s139
    %p143 = pneg %p137
    %p144 = scmp.eq.s32.totalorder %s11, 11
    %p145 = por %p143, %p144
    %p146 = scmp.ne.s32.totalorder %s138, %s141
    %p147 = scmp.eq.s32.totalorder %s11, 0
    %p148 = por %p146, %p147
    %p149 = scmp.ne.s32.totalorder %s138, %s141
    %p150 = scmp.eq.s32.totalorder %s16, 11
    %p151 = por %p149, %p150
    %p152 = scmp.ne.s32.totalorder %s141, %s142
    %p153 = scmp.eq.s32.totalorder %s16, 0
    %p154 = por %p152, %p153
    %p155 = scmp.ne.s32.totalorder %s141, %s142
    %p156 = scmp.eq.s32.totalorder %s17, 11
    %p157 = por %p155, %p156
    %p159 = scmp.ne.s32.totalorder %s142, %s158
    %p160 = scmp.eq.s32.totalorder %s17, 0
    %p161 = por %p159, %p160
    %s162 = ssub.s32 %s18, %s30
    %s163 = ssub.s32 %s19, %s26
    %s164 = sor.u32 %s162, %s163
    %p165 = scmp.eq.s32.totalorder %s164, 0
    %s167 = sadd.s32 %s166, 1
    %s168 = scalar_select %p165, %s166, %s167
    %p171 = pneg %p165
    %p172 = scmp.eq.s32.totalorder %s11, 11
    %p173 = por %p171, %p172
    %p174 = scmp.ne.s32.totalorder %s166, %s169
    %p175 = scmp.eq.s32.totalorder %s11, 0
    %p176 = por %p174, %p175
    %p177 = scmp.ne.s32.totalorder %s166, %s169
    %p178 = scmp.eq.s32.totalorder %s16, 11
    %p179 = por %p177, %p178
    %p180 = scmp.ne.s32.totalorder %s169, %s170
    %p181 = scmp.eq.s32.totalorder %s16, 0
    %p182 = por %p180, %p181
    %p183 = scmp.ne.s32.totalorder %s169, %s170
    %p184 = scmp.eq.s32.totalorder %s17, 11
    %p185 = por %p183, %p184
    %p187 = scmp.ne.s32.totalorder %s170, %s186
    %p188 = scmp.eq.s32.totalorder %s17, 0
    %p189 = por %p187, %p188
    %p190 = scmp.le.s32.totalorder 1, %s11
    %p191 = scmp.lt.s32.totalorder %s11, 13
    %p192 = pnand %p190, %p191
    %p193 = pneg %p192
    // Predicated region
    $region9: #{variable_shape_attention.1} parent=5 // pred_check
      _
    $region10: #{variable_shape_attention.1} parent=5 // pred_check_branch
      %195 = sbr.rel (%p192) target = $region12
    $region11: #{variable_shape_attention.1} parent=5 // pred_region
      %s196 = ssub.s32 %s11, 1
      // Predicated region
      $region13: #{variable_shape_attention.1} parent=11 // pred_check
        %p197 = pneg %p128
      $region14: #{variable_shape_attention.1} parent=11 // pred_check_branch
        %199 = sbr.rel (%p197) target = $region16
      $region15: #{variable_shape_attention.1} parent=11 // pred_region
        _
      $region16: #{variable_shape_attention.1} parent=11 // pred_fallthru
        _
    $region12: #{variable_shape_attention.1} parent=5 // pred_fallthru
      _
    %p200 = scmp.lt.s32.totalorder %s11, 12
    // Predicated region
    $region17: #{variable_shape_attention.1} parent=5 // pred_check
      %p201 = pneg %p200
    $region18: #{variable_shape_attention.1} parent=5 // pred_check_branch
      %203 = sbr.rel (%p201) target = $region20
    $region19: #{variable_shape_attention.1} parent=5 // pred_region
      // Predicated region
      $region21: #{variable_shape_attention.1} parent=19 // pred_check
        %p204 = pneg %p45
      $region22: #{variable_shape_attention.1} parent=19 // pred_check_branch
        %206 = sbr.rel (%p204) target = $region24
      $region23: #{variable_shape_attention.1} parent=19 // pred_region
        %p207 = scmp.lt.s32.totalorder %s18, 1
        %s208 = scalar_select %p207, %s18, 1
        %p209 = scmp.lt.s32.totalorder %s19, 5
        %s210 = scalar_select %p209, %s19, 5
        %s211 = smul.addr %s210, 64
        %s212 = smul.addr %s208, 384
        %s213 = sadd.s32 %s211, %s212
        %s214 = smul.addr %s213, 4
        %s215 = scalar_lea.vmem %s0, %s214
      $region24: #{variable_shape_attention.1} parent=19 // pred_fallthru
        _
      // Predicated region
      $region25: #{variable_shape_attention.1} parent=19 // pred_check
        %p216 = pneg %p73
      $region26: #{variable_shape_attention.1} parent=19 // pred_check_branch
        %218 = sbr.rel (%p216) target = $region28
      $region27: #{variable_shape_attention.1} parent=19 // pred_region
        %p219 = scmp.lt.s32.totalorder %s18, 1
        %s220 = scalar_select %p219, %s18, 1
        %p221 = scmp.lt.s32.totalorder %s19, 5
        %s222 = scalar_select %p221, %s19, 5
        %s223 = smul.addr %s222, 64
        %s224 = smul.addr %s220, 384
        %s225 = sadd.s32 %s223, %s224
        %s226 = smul.addr %s225, 4
        %s227 = scalar_lea.vmem %s1, %s226
      $region28: #{variable_shape_attention.1} parent=19 // pred_fallthru
        _
      // Predicated region
      $region29: #{variable_shape_attention.1} parent=19 // pred_check
        %p228 = pneg %p101
      $region30: #{variable_shape_attention.1} parent=19 // pred_check_branch
        %230 = sbr.rel (%p228) target = $region32
      $region31: #{variable_shape_attention.1} parent=19 // pred_region
        %p231 = scmp.lt.s32.totalorder %s18, 1
        %s232 = scalar_select %p231, %s18, 1
        %p233 = scmp.lt.s32.totalorder %s19, 5
        %s234 = scalar_select %p233, %s19, 5
        %s235 = smul.addr %s234, 64
        %s236 = smul.addr %s232, 384
        %s237 = sadd.s32 %s235, %s236
        %s238 = smul.addr %s237, 4
        %s239 = scalar_lea.vmem %s2, %s238
      $region32: #{variable_shape_attention.1} parent=19 // pred_fallthru
        _
      // Predicated region
      $region33: #{variable_shape_attention.1} parent=19 // pred_check
        %p240 = pneg %p148
      $region34: #{variable_shape_attention.1} parent=19 // pred_check_branch
        %242 = sbr.rel (%p240) target = $region36
      $region35: #{variable_shape_attention.1} parent=19 // pred_region
        %p243 = scmp.lt.s32.totalorder %s19, 5
        %s244 = scalar_select %p243, %s19, 5
        %s245 = smul.addr %s244, 16
        %s246 = smul.addr %s245, 8
        %s247 = scalar_lea.vmem %s4, %s246
      $region36: #{variable_shape_attention.1} parent=19 // pred_fallthru
        _
    $region20: #{variable_shape_attention.1} parent=5 // pred_fallthru
      _
    %p248 = scmp.le.s32.totalorder 1, %s11
    %p249 = scmp.lt.s32.totalorder %s11, 13
    %p250 = pnand %p248, %p249
    %p251 = pneg %p250
    // Predicated region
    $region37: #{variable_shape_attention.1} parent=5 // pred_check
      _
    $region38: #{variable_shape_attention.1} parent=5 // pred_check_branch
      %253 = sbr.rel (%p250) target = $region40
    $region39: #{variable_shape_attention.1} parent=5 // pred_region
      %s254 = ssub.s32 %s11, 1
      %p255 = scmp.lt.s32.totalorder %s20, 1
      %s256 = scalar_select %p255, %s20, 1
      %p257 = scmp.lt.s32.totalorder %s21, 5
      %s258 = scalar_select %p257, %s21, 5
      %s259 = smul.addr %s258, 64
      %s260 = smul.addr %s256, 384
      %s261 = sadd.s32 %s259, %s260
      %s262 = smul.addr %s261, 4
      %s263 = scalar_lea.vmem %s0, %s262
      %p264 = pneg %p51
      %p265 = pneg %p48
      %p266 = scmp.lt.s32.totalorder %s20, 1
      %s267 = scalar_select %p266, %s20, 1
      %p268 = scmp.lt.s32.totalorder %s21, 5
      %s269 = scalar_select %p268, %s21, 5
      %s270 = smul.addr %s269, 64
      %s271 = smul.addr %s267, 384
      %s272 = sadd.s32 %s270, %s271
      %s273 = smul.addr %s272, 4
      %s274 = scalar_lea.vmem %s1, %s273
      %p275 = pneg %p79
      %p276 = pneg %p76
      %p277 = scmp.lt.s32.totalorder %s20, 1
      %s278 = scalar_select %p277, %s20, 1
      %p279 = scmp.lt.s32.totalorder %s21, 5
      %s280 = scalar_select %p279, %s21, 5
      %s281 = smul.addr %s280, 64
      %s282 = smul.addr %s278, 384
      %s283 = sadd.s32 %s281, %s282
      %s284 = smul.addr %s283, 4
      %s285 = scalar_lea.vmem %s2, %s284
      %p286 = pneg %p107
      %p287 = pneg %p104
      %p288 = pneg %p128
      %p289 = pneg %p125
      %p290 = scmp.lt.s32.totalorder %s21, 5
      %s291 = scalar_select %p290, %s21, 5
      %s292 = smul.addr %s291, 16
      %s293 = smul.addr %s292, 8
      %s294 = scalar_lea.vmem %s4, %s293
      %p295 = pneg %p154
      %p296 = pneg %p151
      %p297 = pneg %p182
      %p298 = pneg %p179
      %p299 = scmp.lt.s32.totalorder %s20, 1
      %s300 = scalar_select %p299, %s20, 1
      %p301 = scmp.lt.s32.totalorder %s21, 5
      %s302 = scalar_select %p301, %s21, 5
      %s303 = smul.addr %s302, 64
      %s304 = smul.addr %s300, 384
      %s305 = sadd.s32 %s303, %s304
      %s306 = smul.addr %s305, 8
      %s307 = scalar_lea.vmem %s5, %s306
      %p308 = scmp.lt.s32.totalorder %s20, 1
      %s309 = scalar_select %p308, %s20, 1
      %p310 = scmp.lt.s32.totalorder %s21, 5
      %s311 = scalar_select %p310, %s21, 5
      %s312 = smul.addr %s311, 64
      %s313 = smul.addr %s309, 384
      %s314 = sadd.s32 %s312, %s313
      %s315 = smul.addr %s314, 4
      %s316 = scalar_lea.vmem %s0, %s315
      %p317 = scmp.lt.s32.totalorder %s20, 1
      %s318 = scalar_select %p317, %s20, 1
      %p319 = scmp.lt.s32.totalorder %s21, 5
      %s320 = scalar_select %p319, %s21, 5
      %s321 = smul.addr %s320, 64
      %s322 = smul.addr %s318, 384
      %s323 = sadd.s32 %s321, %s322
      %s324 = smul.addr %s323, 4
      %s325 = scalar_lea.vmem %s1, %s324
      %p326 = scmp.lt.s32.totalorder %s20, 1
      %s327 = scalar_select %p326, %s20, 1
      %p328 = scmp.lt.s32.totalorder %s21, 5
      %s329 = scalar_select %p328, %s21, 5
      %s330 = smul.addr %s329, 64
      %s331 = smul.addr %s327, 384
      %s332 = sadd.s32 %s330, %s331
      %s333 = smul.addr %s332, 4
      %s334 = scalar_lea.vmem %s2, %s333
      %p335 = scmp.lt.s32.totalorder %s21, 5
      %s336 = scalar_select %p335, %s21, 5
      %s337 = smul.addr %s336, 16
      %s338 = smul.addr %s337, 8
      %s339 = scalar_lea.vmem %s4, %s338
      %p340 = scmp.lt.s32.totalorder %s20, 1
      %s341 = scalar_select %p340, %s20, 1
      %p342 = scmp.lt.s32.totalorder %s21, 5
      %s343 = scalar_select %p342, %s21, 5
      %s344 = smul.addr %s343, 64
      %s345 = smul.addr %s341, 384
      %s346 = sadd.s32 %s344, %s345
      %s347 = smul.addr %s346, 8
      %s348 = scalar_lea.vmem %s5, %s347
      %v350 = vld [vmem:[%s316] sm:$0xf]
      %v351 = vld [vmem:[%s316 + $0x4] sm:$0xf]
      %v352 = vld [vmem:[%s316 + $0x8] sm:$0xf]
      %v353 = vld [vmem:[%s316 + $0xc] sm:$0xf]
      %v354 = vld [vmem:[%s316 + $0x10] sm:$0xf]
      %v355 = vld [vmem:[%s316 + $0x14] sm:$0xf]
      %v356 = vld [vmem:[%s316 + $0x18] sm:$0xf]
      %v357 = vld [vmem:[%s316 + $0x1c] sm:$0xf]
      %v358 = vld [vmem:[%s316 + $0x20] sm:$0xf]
      %v359 = vld [vmem:[%s316 + $0x24] sm:$0xf]
      %v360 = vld [vmem:[%s316 + $0x28] sm:$0xf]
      %v361 = vld [vmem:[%s316 + $0x2c] sm:$0xf]
      %v362 = vld [vmem:[%s316 + $0x30] sm:$0xf]
      %v363 = vld [vmem:[%s316 + $0x34] sm:$0xf]
      %v364 = vld [vmem:[%s316 + $0x38] sm:$0xf]
      %v365 = vld [vmem:[%s316 + $0x3c] sm:$0xf]
      %v366 = vld [vmem:[%s316 + $0x40] sm:$0xf]
      %v367 = vld [vmem:[%s316 + $0x44] sm:$0xf]
      %v368 = vld [vmem:[%s316 + $0x48] sm:$0xf]
      %v369 = vld [vmem:[%s316 + $0x4c] sm:$0xf]
      %v370 = vld [vmem:[%s316 + $0x50] sm:$0xf]
      %v371 = vld [vmem:[%s316 + $0x54] sm:$0xf]
      %v372 = vld [vmem:[%s316 + $0x58] sm:$0xf]
      %v373 = vld [vmem:[%s316 + $0x5c] sm:$0xf]
      %v374 = vld [vmem:[%s316 + $0x60] sm:$0xf]
      %v375 = vld [vmem:[%s316 + $0x64] sm:$0xf]
      %v376 = vld [vmem:[%s316 + $0x68] sm:$0xf]
      %v377 = vld [vmem:[%s316 + $0x6c] sm:$0xf]
      %v378 = vld [vmem:[%s316 + $0x70] sm:$0xf]
      %v379 = vld [vmem:[%s316 + $0x74] sm:$0xf]
      %v380 = vld [vmem:[%s316 + $0x78] sm:$0xf]
      %v381 = vld [vmem:[%s316 + $0x7c] sm:$0xf]
      %v382 = vld [vmem:[%s316 + $0x80] sm:$0xf]
      %v383 = vld [vmem:[%s316 + $0x84] sm:$0xf]
      %v384 = vld [vmem:[%s316 + $0x88] sm:$0xf]
      %v385 = vld [vmem:[%s316 + $0x8c] sm:$0xf]
      %v386 = vld [vmem:[%s316 + $0x90] sm:$0xf]
      %v387 = vld [vmem:[%s316 + $0x94] sm:$0xf]
      %v388 = vld [vmem:[%s316 + $0x98] sm:$0xf]
      %v389 = vld [vmem:[%s316 + $0x9c] sm:$0xf]
      %v390 = vld [vmem:[%s316 + $0xa0] sm:$0xf]
      %v391 = vld [vmem:[%s316 + $0xa4] sm:$0xf]
      %v392 = vld [vmem:[%s316 + $0xa8] sm:$0xf]
      %v393 = vld [vmem:[%s316 + $0xac] sm:$0xf]
      %v394 = vld [vmem:[%s316 + $0xb0] sm:$0xf]
      %v395 = vld [vmem:[%s316 + $0xb4] sm:$0xf]
      %v396 = vld [vmem:[%s316 + $0xb8] sm:$0xf]
      %v397 = vld [vmem:[%s316 + $0xbc] sm:$0xf]
      %v398 = vld [vmem:[%s316 + $0xc0] sm:$0xf]
      %v399 = vld [vmem:[%s316 + $0xc4] sm:$0xf]
      %v400 = vld [vmem:[%s316 + $0xc8] sm:$0xf]
      %v401 = vld [vmem:[%s316 + $0xcc] sm:$0xf]
      %v402 = vld [vmem:[%s316 + $0xd0] sm:$0xf]
      %v403 = vld [vmem:[%s316 + $0xd4] sm:$0xf]
      %v404 = vld [vmem:[%s316 + $0xd8] sm:$0xf]
      %v405 = vld [vmem:[%s316 + $0xdc] sm:$0xf]
      %v406 = vld [vmem:[%s316 + $0xe0] sm:$0xf]
      %v407 = vld [vmem:[%s316 + $0xe4] sm:$0xf]
      %v408 = vld [vmem:[%s316 + $0xe8] sm:$0xf]
      %v409 = vld [vmem:[%s316 + $0xec] sm:$0xf]
      %v410 = vld [vmem:[%s316 + $0xf0] sm:$0xf]
      %v411 = vld [vmem:[%s316 + $0xf4] sm:$0xf]
      %v412 = vld [vmem:[%s316 + $0xf8] sm:$0xf]
      %v413 = vld [vmem:[%s316 + $0xfc] sm:$0xf]
      %v414 = vld [vmem:[%s325] sm:$0xf]
      %v415 = vld [vmem:[%s325 + $0x4] sm:$0xf]
      %v416 = vld [vmem:[%s325 + $0x8] sm:$0xf]
      %v417 = vld [vmem:[%s325 + $0xc] sm:$0xf]
      %v418 = vld [vmem:[%s325 + $0x10] sm:$0xf]
      %v419 = vld [vmem:[%s325 + $0x14] sm:$0xf]
      %v420 = vld [vmem:[%s325 + $0x18] sm:$0xf]
      %v421 = vld [vmem:[%s325 + $0x1c] sm:$0xf]
      %v422 = vld [vmem:[%s325 + $0x20] sm:$0xf]
      %v423 = vld [vmem:[%s325 + $0x24] sm:$0xf]
      %v424 = vld [vmem:[%s325 + $0x28] sm:$0xf]
      %v425 = vld [vmem:[%s325 + $0x2c] sm:$0xf]
      %v426 = vld [vmem:[%s325 + $0x30] sm:$0xf]
      %v427 = vld [vmem:[%s325 + $0x34] sm:$0xf]
      %v428 = vld [vmem:[%s325 + $0x38] sm:$0xf]
      %v429 = vld [vmem:[%s325 + $0x3c] sm:$0xf]
      %v430 = vld [vmem:[%s325 + $0x40] sm:$0xf]
      %v431 = vld [vmem:[%s325 + $0x44] sm:$0xf]
      %v432 = vld [vmem:[%s325 + $0x48] sm:$0xf]
      %v433 = vld [vmem:[%s325 + $0x4c] sm:$0xf]
      %v434 = vld [vmem:[%s325 + $0x50] sm:$0xf]
      %v435 = vld [vmem:[%s325 + $0x54] sm:$0xf]
      %v436 = vld [vmem:[%s325 + $0x58] sm:$0xf]
      %v437 = vld [vmem:[%s325 + $0x5c] sm:$0xf]
      %v438 = vld [vmem:[%s325 + $0x60] sm:$0xf]
      %v439 = vld [vmem:[%s325 + $0x64] sm:$0xf]
      %v440 = vld [vmem:[%s325 + $0x68] sm:$0xf]
      %v441 = vld [vmem:[%s325 + $0x6c] sm:$0xf]
      %v442 = vld [vmem:[%s325 + $0x70] sm:$0xf]
      %v443 = vld [vmem:[%s325 + $0x74] sm:$0xf]
      %v444 = vld [vmem:[%s325 + $0x78] sm:$0xf]
      %v445 = vld [vmem:[%s325 + $0x7c] sm:$0xf]
      %v446 = vld [vmem:[%s325 + $0x80] sm:$0xf]
      %v447 = vld [vmem:[%s325 + $0x84] sm:$0xf]
      %v448 = vld [vmem:[%s325 + $0x88] sm:$0xf]
      %v449 = vld [vmem:[%s325 + $0x8c] sm:$0xf]
      %v450 = vld [vmem:[%s325 + $0x90] sm:$0xf]
      %v451 = vld [vmem:[%s325 + $0x94] sm:$0xf]
      %v452 = vld [vmem:[%s325 + $0x98] sm:$0xf]
      %v453 = vld [vmem:[%s325 + $0x9c] sm:$0xf]
      %v454 = vld [vmem:[%s325 + $0xa0] sm:$0xf]
      %v455 = vld [vmem:[%s325 + $0xa4] sm:$0xf]
      %v456 = vld [vmem:[%s325 + $0xa8] sm:$0xf]
      %v457 = vld [vmem:[%s325 + $0xac] sm:$0xf]
      %v458 = vld [vmem:[%s325 + $0xb0] sm:$0xf]
      %v459 = vld [vmem:[%s325 + $0xb4] sm:$0xf]
      %v460 = vld [vmem:[%s325 + $0xb8] sm:$0xf]
      %v461 = vld [vmem:[%s325 + $0xbc] sm:$0xf]
      %v462 = vld [vmem:[%s325 + $0xc0] sm:$0xf]
      %v463 = vld [vmem:[%s325 + $0xc4] sm:$0xf]
      %v464 = vld [vmem:[%s325 + $0xc8] sm:$0xf]
      %v465 = vld [vmem:[%s325 + $0xcc] sm:$0xf]
      %v466 = vld [vmem:[%s325 + $0xd0] sm:$0xf]
      %v467 = vld [vmem:[%s325 + $0xd4] sm:$0xf]
      %v468 = vld [vmem:[%s325 + $0xd8] sm:$0xf]
      %v469 = vld [vmem:[%s325 + $0xdc] sm:$0xf]
      %v470 = vld [vmem:[%s325 + $0xe0] sm:$0xf]
      %v471 = vld [vmem:[%s325 + $0xe4] sm:$0xf]
      %v472 = vld [vmem:[%s325 + $0xe8] sm:$0xf]
      %v473 = vld [vmem:[%s325 + $0xec] sm:$0xf]
      %v474 = vld [vmem:[%s325 + $0xf0] sm:$0xf]
      %v475 = vld [vmem:[%s325 + $0xf4] sm:$0xf]
      %v476 = vld [vmem:[%s325 + $0xf8] sm:$0xf]
      %v477 = vld [vmem:[%s325 + $0xfc] sm:$0xf]
      %v494 = vunpack.c.l.b16 %v350
      %v495 = vunpack.c.l.b16 %v351
      %v496 = vunpack.c.l.b16 %v352
      %v497 = vunpack.c.l.b16 %v353
      %v498 = vunpack.c.l.b16 %v354
      %v499 = vunpack.c.l.b16 %v355
      %v500 = vunpack.c.l.b16 %v356
      %v501 = vunpack.c.l.b16 %v357
      %v502 = vunpack.c.l.b16 %v358
      %v503 = vunpack.c.l.b16 %v359
      %v504 = vunpack.c.l.b16 %v360
      %v505 = vunpack.c.l.b16 %v361
      %v506 = vunpack.c.l.b16 %v362
      %v507 = vunpack.c.l.b16 %v363
      %v508 = vunpack.c.l.b16 %v364
      %v509 = vunpack.c.l.b16 %v365
      %v510 = vpack.c.b16 %v495, %v494
      %v511 = vpack.c.b16 %v497, %v496
      %v512 = vpack.c.b16 %v499, %v498
      %v513 = vpack.c.b16 %v501, %v500
      %v514 = vpack.c.b16 %v503, %v502
      %v515 = vpack.c.b16 %v505, %v504
      %v516 = vpack.c.b16 %v507, %v506
      %v517 = vpack.c.b16 %v509, %v508
      %v534 = vunpack.c.l.b16 %v414
      %v535 = vunpack.c.l.b16 %v415
      %v536 = vunpack.c.l.b16 %v416
      %v537 = vunpack.c.l.b16 %v417
      %v538 = vunpack.c.l.b16 %v418
      %v539 = vunpack.c.l.b16 %v419
      %v540 = vunpack.c.l.b16 %v420
      %v541 = vunpack.c.l.b16 %v421
      %v542 = vunpack.c.l.b16 %v422
      %v543 = vunpack.c.l.b16 %v423
      %v544 = vunpack.c.l.b16 %v424
      %v545 = vunpack.c.l.b16 %v425
      %v546 = vunpack.c.l.b16 %v426
      %v547 = vunpack.c.l.b16 %v427
      %v548 = vunpack.c.l.b16 %v428
      %v549 = vunpack.c.l.b16 %v429
      %v550 = vpack.c.b16 %v535, %v534
      %v551 = vpack.c.b16 %v537, %v536
      %v552 = vpack.c.b16 %v539, %v538
      %v553 = vpack.c.b16 %v541, %v540
      %v554 = vpack.c.b16 %v543, %v542
      %v555 = vpack.c.b16 %v545, %v544
      %v556 = vpack.c.b16 %v547, %v546
      %v557 = vpack.c.b16 %v549, %v548
      %vm558 = vcmask 130048
      %v560 = vsel %vm558, %v510, 0
      %v563 = vsel %vm558, %v511, 0
      %v566 = vsel %vm558, %v512, 0
      %v569 = vsel %vm558, %v513, 0
      %v572 = vsel %vm558, %v514, 0
      %v575 = vsel %vm558, %v515, 0
      %v578 = vsel %vm558, %v516, 0
      %v581 = vsel %vm558, %v517, 0
      %v584 = vsel %vm558, %v550, 0
      %v587 = vsel %vm558, %v551, 0
      %v590 = vsel %vm558, %v552, 0
      %v593 = vsel %vm558, %v553, 0
      %v596 = vsel %vm558, %v554, 0
      %v599 = vsel %vm558, %v555, 0
      %v602 = vsel %vm558, %v556, 0
      %v605 = vsel %vm558, %v557, 0
      %607 = vmatprep.subr.bf16.mxu0 0
      %608 = vmatpush1.bf16.xpose.msra.mxu0 %v584
      %609 = vmatprep.subr.bf16.mxu0 0
      %610 = vmatpush1.bf16.xpose.msra.mxu0 %v587
      %611 = vmatprep.subr.bf16.mxu0 0
      %612 = vmatpush1.bf16.xpose.msra.mxu0 %v590
      %613 = vmatprep.subr.bf16.mxu0 0
      %614 = vmatpush1.bf16.xpose.msra.mxu0 %v593
      %615 = vmatprep.subr.bf16.mxu0 0
      %616 = vmatpush1.bf16.xpose.msra.mxu0 %v596
      %617 = vmatprep.subr.bf16.mxu0 0
      %618 = vmatpush1.bf16.xpose.msra.mxu0 %v599
      %619 = vmatprep.subr.bf16.mxu0 0
      %620 = vmatpush1.bf16.xpose.msra.mxu0 %v602
      %621 = vmatprep.subr.bf16.mxu0 0
      %622 = vmatpush1.bf16.xpose.msra.mxu0 %v605
      %623 = vmatprep.subr.bf16.mxu0 0
      %624 = vmatpush1.bf16.xpose.msra.mxu0 0
      %625 = vmatprep.subr.bf16.mxu0 0
      %626 = vmatpush1.bf16.xpose.msra.mxu0 0
      %627 = vmatprep.subr.bf16.mxu0 0
      %628 = vmatpush1.bf16.xpose.msra.mxu0 0
      %629 = vmatprep.subr.bf16.mxu0 0
      %630 = vmatpush1.bf16.xpose.msra.mxu0 0
      %631 = vmatprep.subr.bf16.mxu0 0
      %632 = vmatpush1.bf16.xpose.msra.mxu0 0
      %633 = vmatprep.subr.bf16.mxu0 0
      %634 = vmatpush1.bf16.xpose.msra.mxu0 0
      %635 = vmatprep.subr.bf16.mxu0 0
      %636 = vmatpush1.bf16.xpose.msra.mxu0 0
      %637 = vmatprep.subr.bf16.mxu0 0
      %638 = vmatpush1.bf16.xpose.msra.mxu0 0
      %639 = vmatprep.mubr.bf16.mxu0 0
      %640 = vmatmul.mubr.bf16.gmra.mrb[0].mxu0 %v560
      %v641 = vpop.f32.mrb[0].mxu0
      %v642 = vadd.f32 0.0, %v641
      %v643 = vpop.f32.mrb[0].mxu0
      %v644 = vpop.f32.mrb[0].mxu0
      %v645 = vadd.f32 0.0, %v644
      %v646 = vpop.f32.mrb[0].mxu0
      %647 = vmatprep.mubr.bf16.mxu0 0
      %648 = vmatmul.mubr.bf16.gmra.mrb[0].mxu0 %v563
      %v649 = vpop.f32.mrb[0].mxu0
      %v650 = vadd.f32 0.0, %v649
      %v651 = vpop.f32.mrb[0].mxu0
      %v652 = vpop.f32.mrb[0].mxu0
      %v653 = vadd.f32 0.0, %v652
      %v654 = vpop.f32.mrb[0].mxu0
      %655 = vmatprep.mubr.bf16.mxu0 0
      %656 = vmatmul.mubr.bf16.gmra.mrb[0].mxu0 %v566
      %v657 = vpop.f32.mrb[0].mxu0
      %v658 = vadd.f32 0.0, %v657
      %v659 = vpop.f32.mrb[0].mxu0
      %v660 = vpop.f32.mrb[0].mxu0
      %v661 = vadd.f32 0.0, %v660
      %v662 = vpop.f32.mrb[0].mxu0
      %663 = vmatprep.mubr.bf16.mxu0 0
      %664 = vmatmul.mubr.bf16.gmra.mrb[0].mxu0 %v569
      %v665 = vpop.f32.mrb[0].mxu0
      %v666 = vadd.f32 0.0, %v665
      %v667 = vpop.f32.mrb[0].mxu0
      %v668 = vpop.f32.mrb[0].mxu0
      %v669 = vadd.f32 0.0, %v668
      %v670 = vpop.f32.mrb[0].mxu0
      %671 = vmatprep.mubr.bf16.mxu0 0
      %672 = vmatmul.mubr.bf16.gmra.mrb[0].mxu0 %v572
      %v673 = vpop.f32.mrb[0].mxu0
      %v674 = vadd.f32 0.0, %v673
      %v675 = vpop.f32.mrb[0].mxu0
      %v676 = vpop.f32.mrb[0].mxu0
      %v677 = vadd.f32 0.0, %v676
      %v678 = vpop.f32.mrb[0].mxu0
      %679 = vmatprep.mubr.bf16.mxu0 0
      %680 = vmatmul.mubr.bf16.gmra.mrb[0].mxu0 %v575
      %v681 = vpop.f32.mrb[0].mxu0
      %v682 = vadd.f32 0.0, %v681
      %v683 = vpop.f32.mrb[0].mxu0
      %v684 = vpop.f32.mrb[0].mxu0
      %v685 = vadd.f32 0.0, %v684
      %v686 = vpop.f32.mrb[0].mxu0
      %687 = vmatprep.mubr.bf16.mxu0 0
      %688 = vmatmul.mubr.bf16.gmra.mrb[0].mxu0 %v578
      %v689 = vpop.f32.mrb[0].mxu0
      %v690 = vadd.f32 0.0, %v689
      %v691 = vpop.f32.mrb[0].mxu0
      %v692 = vpop.f32.mrb[0].mxu0
      %v693 = vadd.f32 0.0, %v692
      %v694 = vpop.f32.mrb[0].mxu0
      %695 = vmatprep.mubr.bf16.mxu0 0
      %696 = vmatmul.mubr.bf16.gmra.mrb[0].mxu0 %v581
      %v697 = vpop.f32.mrb[0].mxu0
      %v698 = vadd.f32 0.0, %v697
      %v699 = vpop.f32.mrb[0].mxu0
      %v700 = vpop.f32.mrb[0].mxu0
      %v701 = vadd.f32 0.0, %v700
      %v702 = vpop.f32.mrb[0].mxu0
      %703 = vdwg.mxu0
      %v720 = vunpack.c.l.b16 %v366
      %v721 = vunpack.c.l.b16 %v367
      %v722 = vunpack.c.l.b16 %v368
      %v723 = vunpack.c.l.b16 %v369
      %v724 = vunpack.c.l.b16 %v370
      %v725 = vunpack.c.l.b16 %v371
      %v726 = vunpack.c.l.b16 %v372
      %v727 = vunpack.c.l.b16 %v373
      %v728 = vunpack.c.l.b16 %v374
      %v729 = vunpack.c.l.b16 %v375
      %v730 = vunpack.c.l.b16 %v376
      %v731 = vunpack.c.l.b16 %v377
      %v732 = vunpack.c.l.b16 %v378
      %v733 = vunpack.c.l.b16 %v379
      %v734 = vunpack.c.l.b16 %v380
      %v735 = vunpack.c.l.b16 %v381
      %v736 = vpack.c.b16 %v721, %v720
      %v737 = vpack.c.b16 %v723, %v722
      %v738 = vpack.c.b16 %v725, %v724
      %v739 = vpack.c.b16 %v727, %v726
      %v740 = vpack.c.b16 %v729, %v728
      %v741 = vpack.c.b16 %v731, %v730
      %v742 = vpack.c.b16 %v733, %v732
      %v743 = vpack.c.b16 %v735, %v734
      %v760 = vunpack.c.l.b16 %v430
      %v761 = vunpack.c.l.b16 %v431
      %v762 = vunpack.c.l.b16 %v432
      %v763 = vunpack.c.l.b16 %v433
      %v764 = vunpack.c.l.b16 %v434
      %v765 = vunpack.c.l.b16 %v435
      %v766 = vunpack.c.l.b16 %v436
      %v767 = vunpack.c.l.b16 %v437
      %v768 = vunpack.c.l.b16 %v438
      %v769 = vunpack.c.l.b16 %v439
      %v770 = vunpack.c.l.b16 %v440
      %v771 = vunpack.c.l.b16 %v441
      %v772 = vunpack.c.l.b16 %v442
      %v773 = vunpack.c.l.b16 %v443
      %v774 = vunpack.c.l.b16 %v444
      %v775 = vunpack.c.l.b16 %v445
      %v776 = vpack.c.b16 %v761, %v760
      %v777 = vpack.c.b16 %v763, %v762
      %v778 = vpack.c.b16 %v765, %v764
      %v779 = vpack.c.b16 %v767, %v766
      %v780 = vpack.c.b16 %v769, %v768
      %v781 = vpack.c.b16 %v771, %v770
      %v782 = vpack.c.b16 %v773, %v772
      %v783 = vpack.c.b16 %v775, %v774
      %v785 = vsel %vm558, %v736, 0
      %v788 = vsel %vm558, %v737, 0
      %v791 = vsel %vm558, %v738, 0
      %v794 = vsel %vm558, %v739, 0
      %v797 = vsel %vm558, %v740, 0
      %v800 = vsel %vm558, %v741, 0
      %v803 = vsel %vm558, %v742, 0
      %v806 = vsel %vm558, %v743, 0
      %v809 = vsel %vm558, %v776, 0
      %v812 = vsel %vm558, %v777, 0
      %v815 = vsel %vm558, %v778, 0
      %v818 = vsel %vm558, %v779, 0
      %v821 = vsel %vm558, %v780, 0
      %v824 = vsel %vm558, %v781, 0
      %v827 = vsel %vm558, %v782, 0
      %v830 = vsel %vm558, %v783, 0
      %832 = vmatprep.subr.bf16.mxu0 0
      %833 = vmatpush1.bf16.xpose.msra.mxu0 %v809
      %834 = vmatprep.subr.bf16.mxu0 0
      %835 = vmatpush1.bf16.xpose.msra.mxu0 %v812
      %836 = vmatprep.subr.bf16.mxu0 0
      %837 = vmatpush1.bf16.xpose.msra.mxu0 %v815
      %838 = vmatprep.subr.bf16.mxu0 0
      %839 = vmatpush1.bf16.xpose.msra.mxu0 %v818
      %840 = vmatprep.subr.bf16.mxu0 0
      %841 = vmatpush1.bf16.xpose.msra.mxu0 %v821
      %842 = vmatprep.subr.bf16.mxu0 0
      %843 = vmatpush1.bf16.xpose.msra.mxu0 %v824
      %844 = vmatprep.subr.bf16.mxu0 0
      %845 = vmatpush1.bf16.xpose.msra.mxu0 %v827
      %846 = vmatprep.subr.bf16.mxu0 0
      %847 = vmatpush1.bf16.xpose.msra.mxu0 %v830
      %848 = vmatprep.subr.bf16.mxu0 0
      %849 = vmatpush1.bf16.xpose.msra.mxu0 0
      %850 = vmatprep.subr.bf16.mxu0 0
      %851 = vmatpush1.bf16.xpose.msra.mxu0 0
      %852 = vmatprep.subr.bf16.mxu0 0
      %853 = vmatpush1.bf16.xpose.msra.mxu0 0
      %854 = vmatprep.subr.bf16.mxu0 0
      %855 = vmatpush1.bf16.xpose.msra.mxu0 0
      %856 = vmatprep.subr.bf16.mxu0 0
      %857 = vmatpush1.bf16.xpose.msra.mxu0 0
      %858 = vmatprep.subr.bf16.mxu0 0
      %859 = vmatpush1.bf16.xpose.msra.mxu0 0
      %860 = vmatprep.subr.bf16.mxu0 0
      %861 = vmatpush1.bf16.xpose.msra.mxu0 0
      %862 = vmatprep.subr.bf16.mxu0 0
      %863 = vmatpush1.bf16.xpose.msra.mxu0 0
      %864 = vmatprep.mubr.bf16.mxu0 0
      %865 = vmatmul.mubr.bf16.gmra.mrb[0].mxu0 %v785
      %v866 = vpop.f32.mrb[0].mxu0
      %v867 = vadd.f32 0.0, %v866
      %v868 = vpop.f32.mrb[0].mxu0
      %v869 = vpop.f32.mrb[0].mxu0
      %v870 = vadd.f32 0.0, %v869
      %v871 = vpop.f32.mrb[0].mxu0
      %872 = vmatprep.mubr.bf16.mxu0 0
      %873 = vmatmul.mubr.bf16.gmra.mrb[0].mxu0 %v788
      %v874 = vpop.f32.mrb[0].mxu0
      %v875 = vadd.f32 0.0, %v874
      %v876 = vpop.f32.mrb[0].mxu0
      %v877 = vpop.f32.mrb[0].mxu0
      %v878 = vadd.f32 0.0, %v877
      %v879 = vpop.f32.mrb[0].mxu0
      %880 = vmatprep.mubr.bf16.mxu0 0
      %881 = vmatmul.mubr.bf16.gmra.mrb[0].mxu0 %v791
      %v882 = vpop.f32.mrb[0].mxu0
      %v883 = vadd.f32 0.0, %v882
      %v884 = vpop.f32.mrb[0].mxu0
      %v885 = vpop.f32.mrb[0].mxu0
      %v886 = vadd.f32 0.0, %v885
      %v887 = vpop.f32.mrb[0].mxu0
      %888 = vmatprep.mubr.bf16.mxu0 0
      %889 = vmatmul.mubr.bf16.gmra.mrb[0].mxu0 %v794
      %v890 = vpop.f32.mrb[0].mxu0
      %v891 = vadd.f32 0.0, %v890
      %v892 = vpop.f32.mrb[0].mxu0
      %v893 = vpop.f32.mrb[0].mxu0
      %v894 = vadd.f32 0.0, %v893
      %v895 = vpop.f32.mrb[0].mxu0
      %896 = vmatprep.mubr.bf16.mxu0 0
      %897 = vmatmul.mubr.bf16.gmra.mrb[0].mxu0 %v797
      %v898 = vpop.f32.mrb[0].mxu0
      %v899 = vadd.f32 0.0, %v898
      %v900 = vpop.f32.mrb[0].mxu0
      %v901 = vpop.f32.mrb[0].mxu0
      %v902 = vadd.f32 0.0, %v901
      %v903 = vpop.f32.mrb[0].mxu0
      %904 = vmatprep.mubr.bf16.mxu0 0
      %905 = vmatmul.mubr.bf16.gmra.mrb[0].mxu0 %v800
      %v906 = vpop.f32.mrb[0].mxu0
      %v907 = vadd.f32 0.0, %v906
      %v908 = vpop.f32.mrb[0].mxu0
      %v909 = vpop.f32.mrb[0].mxu0
      %v910 = vadd.f32 0.0, %v909
      %v911 = vpop.f32.mrb[0].mxu0
      %912 = vmatprep.mubr.bf16.mxu0 0
      %913 = vmatmul.mubr.bf16.gmra.mrb[0].mxu0 %v803
      %v914 = vpop.f32.mrb[0].mxu0
      %v915 = vadd.f32 0.0, %v914
      %v916 = vpop.f32.mrb[0].mxu0
      %v917 = vpop.f32.mrb[0].mxu0
      %v918 = vadd.f32 0.0, %v917
      %v919 = vpop.f32.mrb[0].mxu0
      %920 = vmatprep.mubr.bf16.mxu0 0
      %921 = vmatmul.mubr.bf16.gmra.mrb[0].mxu0 %v806
      %v922 = vpop.f32.mrb[0].mxu0
      %v923 = vadd.f32 0.0, %v922
      %v924 = vpop.f32.mrb[0].mxu0
      %v925 = vpop.f32.mrb[0].mxu0
      %v926 = vadd.f32 0.0, %v925
      %v927 = vpop.f32.mrb[0].mxu0
      %928 = vdwg.mxu0
      %v945 = vunpack.c.l.b16 %v382
      %v946 = vunpack.c.l.b16 %v383
      %v947 = vunpack.c.l.b16 %v384
      %v948 = vunpack.c.l.b16 %v385
      %v949 = vunpack.c.l.b16 %v386
      %v950 = vunpack.c.l.b16 %v387
      %v951 = vunpack.c.l.b16 %v388
      %v952 = vunpack.c.l.b16 %v389
      %v953 = vunpack.c.l.b16 %v390
      %v954 = vunpack.c.l.b16 %v391
      %v955 = vunpack.c.l.b16 %v392
      %v956 = vunpack.c.l.b16 %v393
      %v957 = vunpack.c.l.b16 %v394
      %v958 = vunpack.c.l.b16 %v395
      %v959 = vunpack.c.l.b16 %v396
      %v960 = vunpack.c.l.b16 %v397
      %v961 = vpack.c.b16 %v946, %v945
      %v962 = vpack.c.b16 %v948, %v947
      %v963 = vpack.c.b16 %v950, %v949
      %v964 = vpack.c.b16 %v952, %v951
      %v965 = vpack.c.b16 %v954, %v953
      %v966 = vpack.c.b16 %v956, %v955
      %v967 = vpack.c.b16 %v958, %v957
      %v968 = vpack.c.b16 %v960, %v959
      %v985 = vunpack.c.l.b16 %v446
      %v986 = vunpack.c.l.b16 %v447
      %v987 = vunpack.c.l.b16 %v448
      %v988 = vunpack.c.l.b16 %v449
      %v989 = vunpack.c.l.b16 %v450
      %v990 = vunpack.c.l.b16 %v451
      %v991 = vunpack.c.l.b16 %v452
      %v992 = vunpack.c.l.b16 %v453
      %v993 = vunpack.c.l.b16 %v454
      %v994 = vunpack.c.l.b16 %v455
      %v995 = vunpack.c.l.b16 %v456
      %v996 = vunpack.c.l.b16 %v457
      %v997 = vunpack.c.l.b16 %v458
      %v998 = vunpack.c.l.b16 %v459
      %v999 = vunpack.c.l.b16 %v460
      %v1000 = vunpack.c.l.b16 %v461
      %v1001 = vpack.c.b16 %v986, %v985
      %v1002 = vpack.c.b16 %v988, %v987
      %v1003 = vpack.c.b16 %v990, %v989
      %v1004 = vpack.c.b16 %v992, %v991
      %v1005 = vpack.c.b16 %v994, %v993
      %v1006 = vpack.c.b16 %v996, %v995
      %v1007 = vpack.c.b16 %v998, %v997
      %v1008 = vpack.c.b16 %v1000, %v999
      %v1010 = vsel %vm558, %v961, 0
      %v1013 = vsel %vm558, %v962, 0
      %v1016 = vsel %vm558, %v963, 0
      %v1019 = vsel %vm558, %v964, 0
      %v1022 = vsel %vm558, %v965, 0
      %v1025 = vsel %vm558, %v966, 0
      %v1028 = vsel %vm558, %v967, 0
      %v1031 = vsel %vm558, %v968, 0
      %v1034 = vsel %vm558, %v1001, 0
      %v1037 = vsel %vm558, %v1002, 0
      %v1040 = vsel %vm558, %v1003, 0
      %v1043 = vsel %vm558, %v1004, 0
      %v1046 = vsel %vm558, %v1005, 0
      %v1049 = vsel %vm558, %v1006, 0
      %v1052 = vsel %vm558, %v1007, 0
      %v1055 = vsel %vm558, %v1008, 0
      %1057 = vmatprep.subr.bf16.mxu0 0
      %1058 = vmatpush1.bf16.xpose.msra.mxu0 %v1034
      %1059 = vmatprep.subr.bf16.mxu0 0
      %1060 = vmatpush1.bf16.xpose.msra.mxu0 %v1037
      %1061 = vmatprep.subr.bf16.mxu0 0
      %1062 = vmatpush1.bf16.xpose.msra.mxu0 %v1040
      %1063 = vmatprep.subr.bf16.mxu0 0
      %1064 = vmatpush1.bf16.xpose.msra.mxu0 %v1043
      %1065 = vmatprep.subr.bf16.mxu0 0
      %1066 = vmatpush1.bf16.xpose.msra.mxu0 %v1046
      %1067 = vmatprep.subr.bf16.mxu0 0
      %1068 = vmatpush1.bf16.xpose.msra.mxu0 %v1049
      %1069 = vmatprep.subr.bf16.mxu0 0
      %1070 = vmatpush1.bf16.xpose.msra.mxu0 %v1052
      %1071 = vmatprep.subr.bf16.mxu0 0
      %1072 = vmatpush1.bf16.xpose.msra.mxu0 %v1055
      %1073 = vmatprep.subr.bf16.mxu0 0
      %1074 = vmatpush1.bf16.xpose.msra.mxu0 0
      %1075 = vmatprep.subr.bf16.mxu0 0
      %1076 = vmatpush1.bf16.xpose.msra.mxu0 0
      %1077 = vmatprep.subr.bf16.mxu0 0
      %1078 = vmatpush1.bf16.xpose.msra.mxu0 0
      %1079 = vmatprep.subr.bf16.mxu0 0
      %1080 = vmatpush1.bf16.xpose.msra.mxu0 0
      %1081 = vmatprep.subr.bf16.mxu0 0
      %1082 = vmatpush1.bf16.xpose.msra.mxu0 0
      %1083 = vmatprep.subr.bf16.mxu0 0
      %1084 = vmatpush1.bf16.xpose.msra.mxu0 0
      %1085 = vmatprep.subr.bf16.mxu0 0
      %1086 = vmatpush1.bf16.xpose.msra.mxu0 0
      %1087 = vmatprep.subr.bf16.mxu0 0
      %1088 = vmatpush1.bf16.xpose.msra.mxu0 0
      %1089 = vmatprep.mubr.bf16.mxu0 0
      %1090 = vmatmul.mubr.bf16.gmra.mrb[0].mxu0 %v1010
      %v1091 = vpop.f32.mrb[0].mxu0
      %v1092 = vadd.f32 0.0, %v1091
      %v1093 = vpop.f32.mrb[0].mxu0
      %v1094 = vpop.f32.mrb[0].mxu0
      %v1095 = vadd.f32 0.0, %v1094
      %v1096 = vpop.f32.mrb[0].mxu0
      %1097 = vmatprep.mubr.bf16.mxu0 0
      %1098 = vmatmul.mubr.bf16.gmra.mrb[0].mxu0 %v1013
      %v1099 = vpop.f32.mrb[0].mxu0
      %v1100 = vadd.f32 0.0, %v1099
      %v1101 = vpop.f32.mrb[0].mxu0
      %v1102 = vpop.f32.mrb[0].mxu0
      %v1103 = vadd.f32 0.0, %v1102
      %v1104 = vpop.f32.mrb[0].mxu0
      %1105 = vmatprep.mubr.bf16.mxu0 0
      %1106 = vmatmul.mubr.bf16.gmra.mrb[0].mxu0 %v1016
      %v1107 = vpop.f32.mrb[0].mxu0
      %v1108 = vadd.f32 0.0, %v1107
      %v1109 = vpop.f32.mrb[0].mxu0
      %v1110 = vpop.f32.mrb[0].mxu0
      %v1111 = vadd.f32 0.0, %v1110
      %v1112 = vpop.f32.mrb[0].mxu0
      %1113 = vmatprep.mubr.bf16.mxu0 0
      %1114 = vmatmul.mubr.bf16.gmra.mrb[0].mxu0 %v1019
      %v1115 = vpop.f32.mrb[0].mxu0
      %v1116 = vadd.f32 0.0, %v1115
      %v1117 = vpop.f32.mrb[0].mxu0
      %v1118 = vpop.f32.mrb[0].mxu0
      %v1119 = vadd.f32 0.0, %v1118
      %v1120 = vpop.f32.mrb[0].mxu0
      %1121 = vmatprep.mubr.bf16.mxu0 0
      %1122 = vmatmul.mubr.bf16.gmra.mrb[0].mxu0 %v1022
      %v1123 = vpop.f32.mrb[0].mxu0
      %v1124 = vadd.f32 0.0, %v1123
      %v1125 = vpop.f32.mrb[0].mxu0
      %v1126 = vpop.f32.mrb[0].mxu0
      %v1127 = vadd.f32 0.0, %v1126
      %v1128 = vpop.f32.mrb[0].mxu0
      %1129 = vmatprep.mubr.bf16.mxu0 0
      %1130 = vmatmul.mubr.bf16.gmra.mrb[0].mxu0 %v1025
      %v1131 = vpop.f32.mrb[0].mxu0
      %v1132 = vadd.f32 0.0, %v1131
      %v1133 = vpop.f32.mrb[0].mxu0
      %v1134 = vpop.f32.mrb[0].mxu0
      %v1135 = vadd.f32 0.0, %v1134
      %v1136 = vpop.f32.mrb[0].mxu0
      %1137 = vmatprep.mubr.bf16.mxu0 0
      %1138 = vmatmul.mubr.bf16.gmra.mrb[0].mxu0 %v1028
      %v1139 = vpop.f32.mrb[0].mxu0
      %v1140 = vadd.f32 0.0, %v1139
      %v1141 = vpop.f32.mrb[0].mxu0
      %v1142 = vpop.f32.mrb[0].mxu0
      %v1143 = vadd.f32 0.0, %v1142
      %v1144 = vpop.f32.mrb[0].mxu0
      %1145 = vmatprep.mubr.bf16.mxu0 0
      %1146 = vmatmul.mubr.bf16.gmra.mrb[0].mxu0 %v1031
      %v1147 = vpop.f32.mrb[0].mxu0
      %v1148 = vadd.f32 0.0, %v1147
      %v1149 = vpop.f32.mrb[0].mxu0
      %v1150 = vpop.f32.mrb[0].mxu0
      %v1151 = vadd.f32 0.0, %v1150
      %v1152 = vpop.f32.mrb[0].mxu0
      %1153 = vdwg.mxu0
      %v1170 = vunpack.c.l.b16 %v398
      %v1171 = vunpack.c.l.b16 %v399
      %v1172 = vunpack.c.l.b16 %v400
      %v1173 = vunpack.c.l.b16 %v401
      %v1174 = vunpack.c.l.b16 %v402
      %v1175 = vunpack.c.l.b16 %v403
      %v1176 = vunpack.c.l.b16 %v404
      %v1177 = vunpack.c.l.b16 %v405
      %v1178 = vunpack.c.l.b16 %v406
      %v1179 = vunpack.c.l.b16 %v407
      %v1180 = vunpack.c.l.b16 %v408
      %v1181 = vunpack.c.l.b16 %v409
      %v1182 = vunpack.c.l.b16 %v410
      %v1183 = vunpack.c.l.b16 %v411
      %v1184 = vunpack.c.l.b16 %v412
      %v1185 = vunpack.c.l.b16 %v413
      %v1186 = vpack.c.b16 %v1171, %v1170
      %v1187 = vpack.c.b16 %v1173, %v1172
      %v1188 = vpack.c.b16 %v1175, %v1174
      %v1189 = vpack.c.b16 %v1177, %v1176
      %v1190 = vpack.c.b16 %v1179, %v1178
      %v1191 = vpack.c.b16 %v1181, %v1180
      %v1192 = vpack.c.b16 %v1183, %v1182
      %v1193 = vpack.c.b16 %v1185, %v1184
      %v1210 = vunpack.c.l.b16 %v462
      %v1211 = vunpack.c.l.b16 %v463
      %v1212 = vunpack.c.l.b16 %v464
      %v1213 = vunpack.c.l.b16 %v465
      %v1214 = vunpack.c.l.b16 %v466
      %v1215 = vunpack.c.l.b16 %v467
      %v1216 = vunpack.c.l.b16 %v468
      %v1217 = vunpack.c.l.b16 %v469
      %v1218 = vunpack.c.l.b16 %v470
      %v1219 = vunpack.c.l.b16 %v471
      %v1220 = vunpack.c.l.b16 %v472
      %v1221 = vunpack.c.l.b16 %v473
      %v1222 = vunpack.c.l.b16 %v474
      %v1223 = vunpack.c.l.b16 %v475
      %v1224 = vunpack.c.l.b16 %v476
      %v1225 = vunpack.c.l.b16 %v477
      %v1226 = vpack.c.b16 %v1211, %v1210
      %v1227 = vpack.c.b16 %v1213, %v1212
      %v1228 = vpack.c.b16 %v1215, %v1214
      %v1229 = vpack.c.b16 %v1217, %v1216
      %v1230 = vpack.c.b16 %v1219, %v1218
      %v1231 = vpack.c.b16 %v1221, %v1220
      %v1232 = vpack.c.b16 %v1223, %v1222
      %v1233 = vpack.c.b16 %v1225, %v1224
      %v1235 = vsel %vm558, %v1186, 0
      %v1238 = vsel %vm558, %v1187, 0
      %v1241 = vsel %vm558, %v1188, 0
      %v1244 = vsel %vm558, %v1189, 0
      %v1247 = vsel %vm558, %v1190, 0
      %v1250 = vsel %vm558, %v1191, 0
      %v1253 = vsel %vm558, %v1192, 0
      %v1256 = vsel %vm558, %v1193, 0
      %v1259 = vsel %vm558, %v1226, 0
      %v1262 = vsel %vm558, %v1227, 0
      %v1265 = vsel %vm558, %v1228, 0
      %v1268 = vsel %vm558, %v1229, 0
      %v1271 = vsel %vm558, %v1230, 0
      %v1274 = vsel %vm558, %v1231, 0
      %v1277 = vsel %vm558, %v1232, 0
      %v1280 = vsel %vm558, %v1233, 0
      %1282 = vmatprep.subr.bf16.mxu0 0
      %1283 = vmatpush1.bf16.xpose.msra.mxu0 %v1259
      %1284 = vmatprep.subr.bf16.mxu0 0
      %1285 = vmatpush1.bf16.xpose.msra.mxu0 %v1262
      %1286 = vmatprep.subr.bf16.mxu0 0
      %1287 = vmatpush1.bf16.xpose.msra.mxu0 %v1265
      %1288 = vmatprep.subr.bf16.mxu0 0
      %1289 = vmatpush1.bf16.xpose.msra.mxu0 %v1268
      %1290 = vmatprep.subr.bf16.mxu0 0
      %1291 = vmatpush1.bf16.xpose.msra.mxu0 %v1271
      %1292 = vmatprep.subr.bf16.mxu0 0
      %1293 = vmatpush1.bf16.xpose.msra.mxu0 %v1274
      %1294 = vmatprep.subr.bf16.mxu0 0
      %1295 = vmatpush1.bf16.xpose.msra.mxu0 %v1277
      %1296 = vmatprep.subr.bf16.mxu0 0
      %1297 = vmatpush1.bf16.xpose.msra.mxu0 %v1280
      %1298 = vmatprep.subr.bf16.mxu0 0
      %1299 = vmatpush1.bf16.xpose.msra.mxu0 0
      %1300 = vmatprep.subr.bf16.mxu0 0
      %1301 = vmatpush1.bf16.xpose.msra.mxu0 0
      %1302 = vmatprep.subr.bf16.mxu0 0
      %1303 = vmatpush1.bf16.xpose.msra.mxu0 0
      %1304 = vmatprep.subr.bf16.mxu0 0
      %1305 = vmatpush1.bf16.xpose.msra.mxu0 0
      %1306 = vmatprep.subr.bf16.mxu0 0
      %1307 = vmatpush1.bf16.xpose.msra.mxu0 0
      %1308 = vmatprep.subr.bf16.mxu0 0
      %1309 = vmatpush1.bf16.xpose.msra.mxu0 0
      %1310 = vmatprep.subr.bf16.mxu0 0
      %1311 = vmatpush1.bf16.xpose.msra.mxu0 0
      %1312 = vmatprep.subr.bf16.mxu0 0
      %1313 = vmatpush1.bf16.xpose.msra.mxu0 0
      %1314 = vmatprep.mubr.bf16.mxu0 0
      %1315 = vmatmul.mubr.bf16.gmra.mrb[0].mxu0 %v1235
      %v1316 = vpop.f32.mrb[0].mxu0
      %v1317 = vadd.f32 0.0, %v1316
      %v1318 = vpop.f32.mrb[0].mxu0
      %v1319 = vpop.f32.mrb[0].mxu0
      %v1320 = vadd.f32 0.0, %v1319
      %v1321 = vpop.f32.mrb[0].mxu0
      %1322 = vmatprep.mubr.bf16.mxu0 0
      %1323 = vmatmul.mubr.bf16.gmra.mrb[0].mxu0 %v1238
      %v1324 = vpop.f32.mrb[0].mxu0
      %v1325 = vadd.f32 0.0, %v1324
      %v1326 = vpop.f32.mrb[0].mxu0
      %v1327 = vpop.f32.mrb[0].mxu0
      %v1328 = vadd.f32 0.0, %v1327
      %v1329 = vpop.f32.mrb[0].mxu0
      %1330 = vmatprep.mubr.bf16.mxu0 0
      %1331 = vmatmul.mubr.bf16.gmra.mrb[0].mxu0 %v1241
      %v1332 = vpop.f32.mrb[0].mxu0
      %v1333 = vadd.f32 0.0, %v1332
      %v1334 = vpop.f32.mrb[0].mxu0
      %v1335 = vpop.f32.mrb[0].mxu0
      %v1336 = vadd.f32 0.0, %v1335
      %v1337 = vpop.f32.mrb[0].mxu0
      %1338 = vmatprep.mubr.bf16.mxu0 0
      %1339 = vmatmul.mubr.bf16.gmra.mrb[0].mxu0 %v1244
      %v1340 = vpop.f32.mrb[0].mxu0
      %v1341 = vadd.f32 0.0, %v1340
      %v1342 = vpop.f32.mrb[0].mxu0
      %v1343 = vpop.f32.mrb[0].mxu0
      %v1344 = vadd.f32 0.0, %v1343
      %v1345 = vpop.f32.mrb[0].mxu0
      %1346 = vmatprep.mubr.bf16.mxu0 0
      %1347 = vmatmul.mubr.bf16.gmra.mrb[0].mxu0 %v1247
      %v1348 = vpop.f32.mrb[0].mxu0
      %v1349 = vadd.f32 0.0, %v1348
      %v1350 = vpop.f32.mrb[0].mxu0
      %v1351 = vpop.f32.mrb[0].mxu0
      %v1352 = vadd.f32 0.0, %v1351
      %v1353 = vpop.f32.mrb[0].mxu0
      %1354 = vmatprep.mubr.bf16.mxu0 0
      %1355 = vmatmul.mubr.bf16.gmra.mrb[0].mxu0 %v1250
      %v1356 = vpop.f32.mrb[0].mxu0
      %v1357 = vadd.f32 0.0, %v1356
      %v1358 = vpop.f32.mrb[0].mxu0
      %v1359 = vpop.f32.mrb[0].mxu0
      %v1360 = vadd.f32 0.0, %v1359
      %v1361 = vpop.f32.mrb[0].mxu0
      %1362 = vmatprep.mubr.bf16.mxu0 0
      %1363 = vmatmul.mubr.bf16.gmra.mrb[0].mxu0 %v1253
      %v1364 = vpop.f32.mrb[0].mxu0
      %v1365 = vadd.f32 0.0, %v1364
      %v1366 = vpop.f32.mrb[0].mxu0
      %v1367 = vpop.f32.mrb[0].mxu0
      %v1368 = vadd.f32 0.0, %v1367
      %v1369 = vpop.f32.mrb[0].mxu0
      %1370 = vmatprep.mubr.bf16.mxu0 0
      %1371 = vmatmul.mubr.bf16.gmra.mrb[0].mxu0 %v1256
      %v1372 = vpop.f32.mrb[0].mxu0
      %v1373 = vadd.f32 0.0, %v1372
      %v1374 = vpop.f32.mrb[0].mxu0
      %v1375 = vpop.f32.mrb[0].mxu0
      %v1376 = vadd.f32 0.0, %v1375
      %v1377 = vpop.f32.mrb[0].mxu0
      %1378 = vdwg.mxu0
      %v1379 = vmul.f32 %v642, 0.25
      %v1380 = vmul.f32 %v645, 0.25
      %v1381 = vmul.f32 %v650, 0.25
      %v1382 = vmul.f32 %v653, 0.25
      %v1383 = vmul.f32 %v658, 0.25
      %v1384 = vmul.f32 %v661, 0.25
      %v1385 = vmul.f32 %v666, 0.25
      %v1386 = vmul.f32 %v669, 0.25
      %v1387 = vmul.f32 %v674, 0.25
      %v1388 = vmul.f32 %v677, 0.25
      %v1389 = vmul.f32 %v682, 0.25
      %v1390 = vmul.f32 %v685, 0.25
      %v1391 = vmul.f32 %v690, 0.25
      %v1392 = vmul.f32 %v693, 0.25
      %v1393 = vmul.f32 %v698, 0.25
      %v1394 = vmul.f32 %v701, 0.25
      %v1395 = vmul.f32 %v867, 0.25
      %v1396 = vmul.f32 %v870, 0.25
      %v1397 = vmul.f32 %v875, 0.25
      %v1398 = vmul.f32 %v878, 0.25
      %v1399 = vmul.f32 %v883, 0.25
      %v1400 = vmul.f32 %v886, 0.25
      %v1401 = vmul.f32 %v891, 0.25
      %v1402 = vmul.f32 %v894, 0.25
      %v1403 = vmul.f32 %v899, 0.25
      %v1404 = vmul.f32 %v902, 0.25
      %v1405 = vmul.f32 %v907, 0.25
      %v1406 = vmul.f32 %v910, 0.25
      %v1407 = vmul.f32 %v915, 0.25
      %v1408 = vmul.f32 %v918, 0.25
      %v1409 = vmul.f32 %v923, 0.25
      %v1410 = vmul.f32 %v926, 0.25
      %v1411 = vmul.f32 %v1092, 0.25
      %v1412 = vmul.f32 %v1095, 0.25
      %v1413 = vmul.f32 %v1100, 0.25
      %v1414 = vmul.f32 %v1103, 0.25
      %v1415 = vmul.f32 %v1108, 0.25
      %v1416 = vmul.f32 %v1111, 0.25
      %v1417 = vmul.f32 %v1116, 0.25
      %v1418 = vmul.f32 %v1119, 0.25
      %v1419 = vmul.f32 %v1124, 0.25
      %v1420 = vmul.f32 %v1127, 0.25
      %v1421 = vmul.f32 %v1132, 0.25
      %v1422 = vmul.f32 %v1135, 0.25
      %v1423 = vmul.f32 %v1140, 0.25
      %v1424 = vmul.f32 %v1143, 0.25
      %v1425 = vmul.f32 %v1148, 0.25
      %v1426 = vmul.f32 %v1151, 0.25
      %v1427 = vmul.f32 %v1317, 0.25
      %v1428 = vmul.f32 %v1320, 0.25
      %v1429 = vmul.f32 %v1325, 0.25
      %v1430 = vmul.f32 %v1328, 0.25
      %v1431 = vmul.f32 %v1333, 0.25
      %v1432 = vmul.f32 %v1336, 0.25
      %v1433 = vmul.f32 %v1341, 0.25
      %v1434 = vmul.f32 %v1344, 0.25
      %v1435 = vmul.f32 %v1349, 0.25
      %v1436 = vmul.f32 %v1352, 0.25
      %v1437 = vmul.f32 %v1357, 0.25
      %v1438 = vmul.f32 %v1360, 0.25
      %v1439 = vmul.f32 %v1365, 0.25
      %v1440 = vmul.f32 %v1368, 0.25
      %v1441 = vmul.f32 %v1373, 0.25
      %v1442 = vmul.f32 %v1376, 0.25
      %v1443 = vld [vmem:[%s3] sm:$0xff]
      %v1444 = vld [vmem:[%s3 + $0x8] sm:$0xff]
      %v1445 = vld [vmem:[%s3 + $0x10] sm:$0xff]
      %v1446 = vld [vmem:[%s3 + $0x18] sm:$0xff]
      %v1447 = vld [vmem:[%s3 + $0x20] sm:$0xff]
      %v1448 = vld [vmem:[%s3 + $0x28] sm:$0xff]
      %v1449 = vld [vmem:[%s3 + $0x30] sm:$0xff]
      %v1450 = vld [vmem:[%s3 + $0x38] sm:$0xff]
      %v1451 = vld [vmem:[%s3 + $0x40] sm:$0xff]
      %v1452 = vld [vmem:[%s3 + $0x48] sm:$0xff]
      %v1453 = vld [vmem:[%s3 + $0x50] sm:$0xff]
      %v1454 = vld [vmem:[%s3 + $0x58] sm:$0xff]
      %v1455 = vld [vmem:[%s3 + $0x60] sm:$0xff]
      %v1456 = vld [vmem:[%s3 + $0x68] sm:$0xff]
      %v1457 = vld [vmem:[%s3 + $0x70] sm:$0xff]
      %v1458 = vld [vmem:[%s3 + $0x78] sm:$0xff]
      %v1459 = vld [vmem:[%s3 + $0x80] sm:$0xff]
      %v1460 = vld [vmem:[%s3 + $0x88] sm:$0xff]
      %v1461 = vld [vmem:[%s3 + $0x90] sm:$0xff]
      %v1462 = vld [vmem:[%s3 + $0x98] sm:$0xff]
      %v1463 = vld [vmem:[%s3 + $0xa0] sm:$0xff]
      %v1464 = vld [vmem:[%s3 + $0xa8] sm:$0xff]
      %v1465 = vld [vmem:[%s3 + $0xb0] sm:$0xff]
      %v1466 = vld [vmem:[%s3 + $0xb8] sm:$0xff]
      %v1467 = vld [vmem:[%s3 + $0xc0] sm:$0xff]
      %v1468 = vld [vmem:[%s3 + $0xc8] sm:$0xff]
      %v1469 = vld [vmem:[%s3 + $0xd0] sm:$0xff]
      %v1470 = vld [vmem:[%s3 + $0xd8] sm:$0xff]
      %v1471 = vld [vmem:[%s3 + $0xe0] sm:$0xff]
      %v1472 = vld [vmem:[%s3 + $0xe8] sm:$0xff]
      %v1473 = vld [vmem:[%s3 + $0xf0] sm:$0xff]
      %v1474 = vld [vmem:[%s3 + $0xf8] sm:$0xff]
      %v1475 = vld [vmem:[%s3 + $0x100] sm:$0xff]
      %v1476 = vld [vmem:[%s3 + $0x108] sm:$0xff]
      %v1477 = vld [vmem:[%s3 + $0x110] sm:$0xff]
      %v1478 = vld [vmem:[%s3 + $0x118] sm:$0xff]
      %v1479 = vld [vmem:[%s3 + $0x120] sm:$0xff]
      %v1480 = vld [vmem:[%s3 + $0x128] sm:$0xff]
      %v1481 = vld [vmem:[%s3 + $0x130] sm:$0xff]
      %v1482 = vld [vmem:[%s3 + $0x138] sm:$0xff]
      %v1483 = vld [vmem:[%s3 + $0x140] sm:$0xff]
      %v1484 = vld [vmem:[%s3 + $0x148] sm:$0xff]
      %v1485 = vld [vmem:[%s3 + $0x150] sm:$0xff]
      %v1486 = vld [vmem:[%s3 + $0x158] sm:$0xff]
      %v1487 = vld [vmem:[%s3 + $0x160] sm:$0xff]
      %v1488 = vld [vmem:[%s3 + $0x168] sm:$0xff]
      %v1489 = vld [vmem:[%s3 + $0x170] sm:$0xff]
      %v1490 = vld [vmem:[%s3 + $0x178] sm:$0xff]
      %v1491 = vld [vmem:[%s3 + $0x180] sm:$0xff]
      %v1492 = vld [vmem:[%s3 + $0x188] sm:$0xff]
      %v1493 = vld [vmem:[%s3 + $0x190] sm:$0xff]
      %v1494 = vld [vmem:[%s3 + $0x198] sm:$0xff]
      %v1495 = vld [vmem:[%s3 + $0x1a0] sm:$0xff]
      %v1496 = vld [vmem:[%s3 + $0x1a8] sm:$0xff]
      %v1497 = vld [vmem:[%s3 + $0x1b0] sm:$0xff]
      %v1498 = vld [vmem:[%s3 + $0x1b8] sm:$0xff]
      %v1499 = vld [vmem:[%s3 + $0x1c0] sm:$0xff]
      %v1500 = vld [vmem:[%s3 + $0x1c8] sm:$0xff]
      %v1501 = vld [vmem:[%s3 + $0x1d0] sm:$0xff]
      %v1502 = vld [vmem:[%s3 + $0x1d8] sm:$0xff]
      %v1503 = vld [vmem:[%s3 + $0x1e0] sm:$0xff]
      %v1504 = vld [vmem:[%s3 + $0x1e8] sm:$0xff]
      %v1505 = vld [vmem:[%s3 + $0x1f0] sm:$0xff]
      %v1506 = vld [vmem:[%s3 + $0x1f8] sm:$0xff]
      %v1507 = vadd.f32 %v1379, %v1443
      %v1508 = vadd.f32 %v1380, %v1444
      %v1509 = vadd.f32 %v1381, %v1445
      %v1510 = vadd.f32 %v1382, %v1446
      %v1511 = vadd.f32 %v1383, %v1447
      %v1512 = vadd.f32 %v1384, %v1448
      %v1513 = vadd.f32 %v1385, %v1449
      %v1514 = vadd.f32 %v1386, %v1450
      %v1515 = vadd.f32 %v1387, %v1451
      %v1516 = vadd.f32 %v1388, %v1452
      %v1517 = vadd.f32 %v1389, %v1453
      %v1518 = vadd.f32 %v1390, %v1454
      %v1519 = vadd.f32 %v1391, %v1455
      %v1520 = vadd.f32 %v1392, %v1456
      %v1521 = vadd.f32 %v1393, %v1457
      %v1522 = vadd.f32 %v1394, %v1458
      %v1523 = vadd.f32 %v1395, %v1459
      %v1524 = vadd.f32 %v1396, %v1460
      %v1525 = vadd.f32 %v1397, %v1461
      %v1526 = vadd.f32 %v1398, %v1462
      %v1527 = vadd.f32 %v1399, %v1463
      %v1528 = vadd.f32 %v1400, %v1464
      %v1529 = vadd.f32 %v1401, %v1465
      %v1530 = vadd.f32 %v1402, %v1466
      %v1531 = vadd.f32 %v1403, %v1467
      %v1532 = vadd.f32 %v1404, %v1468
      %v1533 = vadd.f32 %v1405, %v1469
      %v1534 = vadd.f32 %v1406, %v1470
      %v1535 = vadd.f32 %v1407, %v1471
      %v1536 = vadd.f32 %v1408, %v1472
      %v1537 = vadd.f32 %v1409, %v1473
      %v1538 = vadd.f32 %v1410, %v1474
      %v1539 = vadd.f32 %v1411, %v1475
      %v1540 = vadd.f32 %v1412, %v1476
      %v1541 = vadd.f32 %v1413, %v1477
      %v1542 = vadd.f32 %v1414, %v1478
      %v1543 = vadd.f32 %v1415, %v1479
      %v1544 = vadd.f32 %v1416, %v1480
      %v1545 = vadd.f32 %v1417, %v1481
      %v1546 = vadd.f32 %v1418, %v1482
      %v1547 = vadd.f32 %v1419, %v1483
      %v1548 = vadd.f32 %v1420, %v1484
      %v1549 = vadd.f32 %v1421, %v1485
      %v1550 = vadd.f32 %v1422, %v1486
      %v1551 = vadd.f32 %v1423, %v1487
      %v1552 = vadd.f32 %v1424, %v1488
      %v1553 = vadd.f32 %v1425, %v1489
      %v1554 = vadd.f32 %v1426, %v1490
      %v1555 = vadd.f32 %v1427, %v1491
      %v1556 = vadd.f32 %v1428, %v1492
      %v1557 = vadd.f32 %v1429, %v1493
      %v1558 = vadd.f32 %v1430, %v1494
      %v1559 = vadd.f32 %v1431, %v1495
      %v1560 = vadd.f32 %v1432, %v1496
      %v1561 = vadd.f32 %v1433, %v1497
      %v1562 = vadd.f32 %v1434, %v1498
      %v1563 = vadd.f32 %v1435, %v1499
      %v1564 = vadd.f32 %v1436, %v1500
      %v1565 = vadd.f32 %v1437, %v1501
      %v1566 = vadd.f32 %v1438, %v1502
      %v1567 = vadd.f32 %v1439, %v1503
      %v1568 = vadd.f32 %v1440, %v1504
      %v1569 = vadd.f32 %v1441, %v1505
      %v1570 = vadd.f32 %v1442, %v1506
      %v1571 = vld [vmem:[%s339] sm:$0xff]
      %v1572 = vld [vmem:[%s339 + $0x8] sm:$0xff]
      %v1573 = vld [vmem:[%s339 + $0x10] sm:$0xff]
      %v1574 = vld [vmem:[%s339 + $0x18] sm:$0xff]
      %v1575 = vld [vmem:[%s339 + $0x20] sm:$0xff]
      %v1576 = vld [vmem:[%s339 + $0x28] sm:$0xff]
      %v1577 = vld [vmem:[%s339 + $0x30] sm:$0xff]
      %v1578 = vld [vmem:[%s339 + $0x38] sm:$0xff]
      %v1579 = vld [vmem:[%s339 + $0x40] sm:$0xff]
      %v1580 = vld [vmem:[%s339 + $0x48] sm:$0xff]
      %v1581 = vld [vmem:[%s339 + $0x50] sm:$0xff]
      %v1582 = vld [vmem:[%s339 + $0x58] sm:$0xff]
      %v1583 = vld [vmem:[%s339 + $0x60] sm:$0xff]
      %v1584 = vld [vmem:[%s339 + $0x68] sm:$0xff]
      %v1585 = vld [vmem:[%s339 + $0x70] sm:$0xff]
      %v1586 = vld [vmem:[%s339 + $0x78] sm:$0xff]
      %v1587 = vadd.f32 %v1507, %v1571
      %v1588 = vadd.f32 %v1508, %v1572
      %v1589 = vadd.f32 %v1509, %v1573
      %v1590 = vadd.f32 %v1510, %v1574
      %v1591 = vadd.f32 %v1511, %v1575
      %v1592 = vadd.f32 %v1512, %v1576
      %v1593 = vadd.f32 %v1513, %v1577
      %v1594 = vadd.f32 %v1514, %v1578
      %v1595 = vadd.f32 %v1515, %v1579
      %v1596 = vadd.f32 %v1516, %v1580
      %v1597 = vadd.f32 %v1517, %v1581
      %v1598 = vadd.f32 %v1518, %v1582
      %v1599 = vadd.f32 %v1519, %v1583
      %v1600 = vadd.f32 %v1520, %v1584
      %v1601 = vadd.f32 %v1521, %v1585
      %v1602 = vadd.f32 %v1522, %v1586
      %v1603 = vadd.f32 %v1523, %v1571
      %v1604 = vadd.f32 %v1524, %v1572
      %v1605 = vadd.f32 %v1525, %v1573
      %v1606 = vadd.f32 %v1526, %v1574
      %v1607 = vadd.f32 %v1527, %v1575
      %v1608 = vadd.f32 %v1528, %v1576
      %v1609 = vadd.f32 %v1529, %v1577
      %v1610 = vadd.f32 %v1530, %v1578
      %v1611 = vadd.f32 %v1531, %v1579
      %v1612 = vadd.f32 %v1532, %v1580
      %v1613 = vadd.f32 %v1533, %v1581
      %v1614 = vadd.f32 %v1534, %v1582
      %v1615 = vadd.f32 %v1535, %v1583
      %v1616 = vadd.f32 %v1536, %v1584
      %v1617 = vadd.f32 %v1537, %v1585
      %v1618 = vadd.f32 %v1538, %v1586
      %v1619 = vadd.f32 %v1539, %v1571
      %v1620 = vadd.f32 %v1540, %v1572
      %v1621 = vadd.f32 %v1541, %v1573
      %v1622 = vadd.f32 %v1542, %v1574
      %v1623 = vadd.f32 %v1543, %v1575
      %v1624 = vadd.f32 %v1544, %v1576
      %v1625 = vadd.f32 %v1545, %v1577
      %v1626 = vadd.f32 %v1546, %v1578
      %v1627 = vadd.f32 %v1547, %v1579
      %v1628 = vadd.f32 %v1548, %v1580
      %v1629 = vadd.f32 %v1549, %v1581
      %v1630 = vadd.f32 %v1550, %v1582
      %v1631 = vadd.f32 %v1551, %v1583
      %v1632 = vadd.f32 %v1552, %v1584
      %v1633 = vadd.f32 %v1553, %v1585
      %v1634 = vadd.f32 %v1554, %v1586
      %v1635 = vadd.f32 %v1555, %v1571
      %v1636 = vadd.f32 %v1556, %v1572
      %v1637 = vadd.f32 %v1557, %v1573
      %v1638 = vadd.f32 %v1558, %v1574
      %v1639 = vadd.f32 %v1559, %v1575
      %v1640 = vadd.f32 %v1560, %v1576
      %v1641 = vadd.f32 %v1561, %v1577
      %v1642 = vadd.f32 %v1562, %v1578
      %v1643 = vadd.f32 %v1563, %v1579
      %v1644 = vadd.f32 %v1564, %v1580
      %v1645 = vadd.f32 %v1565, %v1581
      %v1646 = vadd.f32 %v1566, %v1582
      %v1647 = vadd.f32 %v1567, %v1583
      %v1648 = vadd.f32 %v1568, %v1584
      %v1649 = vadd.f32 %v1569, %v1585
      %v1650 = vadd.f32 %v1570, %v1586
      %1651 = vmax.xlane.f32.xlu0 %v1587
      %v1652 = vpop.xlane.xlu0 %1651
      %1653 = vmax.xlane.f32.xlu0 %v1588
      %v1654 = vpop.xlane.xlu0 %1653
      %1655 = vmax.xlane.f32.xlu0 %v1589
      %v1656 = vpop.xlane.xlu0 %1655
      %1657 = vmax.xlane.f32.xlu0 %v1590
      %v1658 = vpop.xlane.xlu0 %1657
      %1659 = vmax.xlane.f32.xlu0 %v1591
      %v1660 = vpop.xlane.xlu0 %1659
      %1661 = vmax.xlane.f32.xlu0 %v1592
      %v1662 = vpop.xlane.xlu0 %1661
      %1663 = vmax.xlane.f32.xlu0 %v1593
      %v1664 = vpop.xlane.xlu0 %1663
      %1665 = vmax.xlane.f32.xlu0 %v1594
      %v1666 = vpop.xlane.xlu0 %1665
      %1667 = vmax.xlane.f32.xlu0 %v1595
      %v1668 = vpop.xlane.xlu0 %1667
      %1669 = vmax.xlane.f32.xlu0 %v1596
      %v1670 = vpop.xlane.xlu0 %1669
      %1671 = vmax.xlane.f32.xlu0 %v1597
      %v1672 = vpop.xlane.xlu0 %1671
      %1673 = vmax.xlane.f32.xlu0 %v1598
      %v1674 = vpop.xlane.xlu0 %1673
      %1675 = vmax.xlane.f32.xlu0 %v1599
      %v1676 = vpop.xlane.xlu0 %1675
      %1677 = vmax.xlane.f32.xlu0 %v1600
      %v1678 = vpop.xlane.xlu0 %1677
      %1679 = vmax.xlane.f32.xlu0 %v1601
      %v1680 = vpop.xlane.xlu0 %1679
      %1681 = vmax.xlane.f32.xlu0 %v1602
      %v1682 = vpop.xlane.xlu0 %1681
      %1683 = vmax.xlane.f32.xlu0 %v1603
      %v1684 = vpop.xlane.xlu0 %1683
      %1685 = vmax.xlane.f32.xlu0 %v1604
      %v1686 = vpop.xlane.xlu0 %1685
      %1687 = vmax.xlane.f32.xlu0 %v1605
      %v1688 = vpop.xlane.xlu0 %1687
      %1689 = vmax.xlane.f32.xlu0 %v1606
      %v1690 = vpop.xlane.xlu0 %1689
      %1691 = vmax.xlane.f32.xlu0 %v1607
      %v1692 = vpop.xlane.xlu0 %1691
      %1693 = vmax.xlane.f32.xlu0 %v1608
      %v1694 = vpop.xlane.xlu0 %1693
      %1695 = vmax.xlane.f32.xlu0 %v1609
      %v1696 = vpop.xlane.xlu0 %1695
      %1697 = vmax.xlane.f32.xlu0 %v1610
      %v1698 = vpop.xlane.xlu0 %1697
      %1699 = vmax.xlane.f32.xlu0 %v1611
      %v1700 = vpop.xlane.xlu0 %1699
      %1701 = vmax.xlane.f32.xlu0 %v1612
      %v1702 = vpop.xlane.xlu0 %1701
      %1703 = vmax.xlane.f32.xlu0 %v1613
      %v1704 = vpop.xlane.xlu0 %1703
      %1705 = vmax.xlane.f32.xlu0 %v1614
      %v1706 = vpop.xlane.xlu0 %1705
      %1707 = vmax.xlane.f32.xlu0 %v1615
      %v1708 = vpop.xlane.xlu0 %1707
      %1709 = vmax.xlane.f32.xlu0 %v1616
      %v1710 = vpop.xlane.xlu0 %1709
      %1711 = vmax.xlane.f32.xlu0 %v1617
      %v1712 = vpop.xlane.xlu0 %1711
      %1713 = vmax.xlane.f32.xlu0 %v1618
      %v1714 = vpop.xlane.xlu0 %1713
      %1715 = vmax.xlane.f32.xlu0 %v1619
      %v1716 = vpop.xlane.xlu0 %1715
      %1717 = vmax.xlane.f32.xlu0 %v1620
      %v1718 = vpop.xlane.xlu0 %1717
      %1719 = vmax.xlane.f32.xlu0 %v1621
      %v1720 = vpop.xlane.xlu0 %1719
      %1721 = vmax.xlane.f32.xlu0 %v1622
      %v1722 = vpop.xlane.xlu0 %1721
      %1723 = vmax.xlane.f32.xlu0 %v1623
      %v1724 = vpop.xlane.xlu0 %1723
      %1725 = vmax.xlane.f32.xlu0 %v1624
      %v1726 = vpop.xlane.xlu0 %1725
      %1727 = vmax.xlane.f32.xlu0 %v1625
      %v1728 = vpop.xlane.xlu0 %1727
      %1729 = vmax.xlane.f32.xlu0 %v1626
      %v1730 = vpop.xlane.xlu0 %1729
      %1731 = vmax.xlane.f32.xlu0 %v1627
      %v1732 = vpop.xlane.xlu0 %1731
      %1733 = vmax.xlane.f32.xlu0 %v1628
      %v1734 = vpop.xlane.xlu0 %1733
      %1735 = vmax.xlane.f32.xlu0 %v1629
      %v1736 = vpop.xlane.xlu0 %1735
      %1737 = vmax.xlane.f32.xlu0 %v1630
      %v1738 = vpop.xlane.xlu0 %1737
      %1739 = vmax.xlane.f32.xlu0 %v1631
      %v1740 = vpop.xlane.xlu0 %1739
      %1741 = vmax.xlane.f32.xlu0 %v1632
      %v1742 = vpop.xlane.xlu0 %1741
      %1743 = vmax.xlane.f32.xlu0 %v1633
      %v1744 = vpop.xlane.xlu0 %1743
      %1745 = vmax.xlane.f32.xlu0 %v1634
      %v1746 = vpop.xlane.xlu0 %1745
      %1747 = vmax.xlane.f32.xlu0 %v1635
      %v1748 = vpop.xlane.xlu0 %1747
      %1749 = vmax.xlane.f32.xlu0 %v1636
      %v1750 = vpop.xlane.xlu0 %1749
      %1751 = vmax.xlane.f32.xlu0 %v1637
      %v1752 = vpop.xlane.xlu0 %1751
      %1753 = vmax.xlane.f32.xlu0 %v1638
      %v1754 = vpop.xlane.xlu0 %1753
      %1755 = vmax.xlane.f32.xlu0 %v1639
      %v1756 = vpop.xlane.xlu0 %1755
      %1757 = vmax.xlane.f32.xlu0 %v1640
      %v1758 = vpop.xlane.xlu0 %1757
      %1759 = vmax.xlane.f32.xlu0 %v1641
      %v1760 = vpop.xlane.xlu0 %1759
      %1761 = vmax.xlane.f32.xlu0 %v1642
      %v1762 = vpop.xlane.xlu0 %1761
      %1763 = vmax.xlane.f32.xlu0 %v1643
      %v1764 = vpop.xlane.xlu0 %1763
      %1765 = vmax.xlane.f32.xlu0 %v1644
      %v1766 = vpop.xlane.xlu0 %1765
      %1767 = vmax.xlane.f32.xlu0 %v1645
      %v1768 = vpop.xlane.xlu0 %1767
      %1769 = vmax.xlane.f32.xlu0 %v1646
      %v1770 = vpop.xlane.xlu0 %1769
      %1771 = vmax.xlane.f32.xlu0 %v1647
      %v1772 = vpop.xlane.xlu0 %1771
      %1773 = vmax.xlane.f32.xlu0 %v1648
      %v1774 = vpop.xlane.xlu0 %1773
      %1775 = vmax.xlane.f32.xlu0 %v1649
      %v1776 = vpop.xlane.xlu0 %1775
      %1777 = vmax.xlane.f32.xlu0 %v1650
      %v1778 = vpop.xlane.xlu0 %1777
      %v1779 = vsub.f32 %v1587, %v1652
      %v1780 = vsub.f32 %v1588, %v1654
      %v1781 = vsub.f32 %v1589, %v1656
      %v1782 = vsub.f32 %v1590, %v1658
      %v1783 = vsub.f32 %v1591, %v1660
      %v1784 = vsub.f32 %v1592, %v1662
      %v1785 = vsub.f32 %v1593, %v1664
      %v1786 = vsub.f32 %v1594, %v1666
      %v1787 = vsub.f32 %v1595, %v1668
      %v1788 = vsub.f32 %v1596, %v1670
      %v1789 = vsub.f32 %v1597, %v1672
      %v1790 = vsub.f32 %v1598, %v1674
      %v1791 = vsub.f32 %v1599, %v1676
      %v1792 = vsub.f32 %v1600, %v1678
      %v1793 = vsub.f32 %v1601, %v1680
      %v1794 = vsub.f32 %v1602, %v1682
      %v1795 = vsub.f32 %v1603, %v1684
      %v1796 = vsub.f32 %v1604, %v1686
      %v1797 = vsub.f32 %v1605, %v1688
      %v1798 = vsub.f32 %v1606, %v1690
      %v1799 = vsub.f32 %v1607, %v1692
      %v1800 = vsub.f32 %v1608, %v1694
      %v1801 = vsub.f32 %v1609, %v1696
      %v1802 = vsub.f32 %v1610, %v1698
      %v1803 = vsub.f32 %v1611, %v1700
      %v1804 = vsub.f32 %v1612, %v1702
      %v1805 = vsub.f32 %v1613, %v1704
      %v1806 = vsub.f32 %v1614, %v1706
      %v1807 = vsub.f32 %v1615, %v1708
      %v1808 = vsub.f32 %v1616, %v1710
      %v1809 = vsub.f32 %v1617, %v1712
      %v1810 = vsub.f32 %v1618, %v1714
      %v1811 = vsub.f32 %v1619, %v1716
      %v1812 = vsub.f32 %v1620, %v1718
      %v1813 = vsub.f32 %v1621, %v1720
      %v1814 = vsub.f32 %v1622, %v1722
      %v1815 = vsub.f32 %v1623, %v1724
      %v1816 = vsub.f32 %v1624, %v1726
      %v1817 = vsub.f32 %v1625, %v1728
      %v1818 = vsub.f32 %v1626, %v1730
      %v1819 = vsub.f32 %v1627, %v1732
      %v1820 = vsub.f32 %v1628, %v1734
      %v1821 = vsub.f32 %v1629, %v1736
      %v1822 = vsub.f32 %v1630, %v1738
      %v1823 = vsub.f32 %v1631, %v1740
      %v1824 = vsub.f32 %v1632, %v1742
      %v1825 = vsub.f32 %v1633, %v1744
      %v1826 = vsub.f32 %v1634, %v1746
      %v1827 = vsub.f32 %v1635, %v1748
      %v1828 = vsub.f32 %v1636, %v1750
      %v1829 = vsub.f32 %v1637, %v1752
      %v1830 = vsub.f32 %v1638, %v1754
      %v1831 = vsub.f32 %v1639, %v1756
      %v1832 = vsub.f32 %v1640, %v1758
      %v1833 = vsub.f32 %v1641, %v1760
      %v1834 = vsub.f32 %v1642, %v1762
      %v1835 = vsub.f32 %v1643, %v1764
      %v1836 = vsub.f32 %v1644, %v1766
      %v1837 = vsub.f32 %v1645, %v1768
      %v1838 = vsub.f32 %v1646, %v1770
      %v1839 = vsub.f32 %v1647, %v1772
      %v1840 = vsub.f32 %v1648, %v1774
      %v1841 = vsub.f32 %v1649, %v1776
      %v1842 = vsub.f32 %v1650, %v1778
      %v1843 = vmul.f32 %v1779, 1.442695
      %v1844 = vpow.pop %v1843
      %v1845 = vmul.f32 %v1780, 1.442695
      %v1846 = vpow.pop %v1845
      %v1847 = vmul.f32 %v1781, 1.442695
      %v1848 = vpow.pop %v1847
      %v1849 = vmul.f32 %v1782, 1.442695
      %v1850 = vpow.pop %v1849
      %v1851 = vmul.f32 %v1783, 1.442695
      %v1852 = vpow.pop %v1851
      %v1853 = vmul.f32 %v1784, 1.442695
      %v1854 = vpow.pop %v1853
      %v1855 = vmul.f32 %v1785, 1.442695
      %v1856 = vpow.pop %v1855
      %v1857 = vmul.f32 %v1786, 1.442695
      %v1858 = vpow.pop %v1857
      %v1859 = vmul.f32 %v1787, 1.442695
      %v1860 = vpow.pop %v1859
      %v1861 = vmul.f32 %v1788, 1.442695
      %v1862 = vpow.pop %v1861
      %v1863 = vmul.f32 %v1789, 1.442695
      %v1864 = vpow.pop %v1863
      %v1865 = vmul.f32 %v1790, 1.442695
      %v1866 = vpow.pop %v1865
      %v1867 = vmul.f32 %v1791, 1.442695
      %v1868 = vpow.pop %v1867
      %v1869 = vmul.f32 %v1792, 1.442695
      %v1870 = vpow.pop %v1869
      %v1871 = vmul.f32 %v1793, 1.442695
      %v1872 = vpow.pop %v1871
      %v1873 = vmul.f32 %v1794, 1.442695
      %v1874 = vpow.pop %v1873
      %v1875 = vmul.f32 %v1795, 1.442695
      %v1876 = vpow.pop %v1875
      %v1877 = vmul.f32 %v1796, 1.442695
      %v1878 = vpow.pop %v1877
      %v1879 = vmul.f32 %v1797, 1.442695
      %v1880 = vpow.pop %v1879
      %v1881 = vmul.f32 %v1798, 1.442695
      %v1882 = vpow.pop %v1881
      %v1883 = vmul.f32 %v1799, 1.442695
      %v1884 = vpow.pop %v1883
      %v1885 = vmul.f32 %v1800, 1.442695
      %v1886 = vpow.pop %v1885
      %v1887 = vmul.f32 %v1801, 1.442695
      %v1888 = vpow.pop %v1887
      %v1889 = vmul.f32 %v1802, 1.442695
      %v1890 = vpow.pop %v1889
      %v1891 = vmul.f32 %v1803, 1.442695
      %v1892 = vpow.pop %v1891
      %v1893 = vmul.f32 %v1804, 1.442695
      %v1894 = vpow.pop %v1893
      %v1895 = vmul.f32 %v1805, 1.442695
      %v1896 = vpow.pop %v1895
      %v1897 = vmul.f32 %v1806, 1.442695
      %v1898 = vpow.pop %v1897
      %v1899 = vmul.f32 %v1807, 1.442695
      %v1900 = vpow.pop %v1899
      %v1901 = vmul.f32 %v1808, 1.442695
      %v1902 = vpow.pop %v1901
      %v1903 = vmul.f32 %v1809, 1.442695
      %v1904 = vpow.pop %v1903
      %v1905 = vmul.f32 %v1810, 1.442695
      %v1906 = vpow.pop %v1905
      %v1907 = vmul.f32 %v1811, 1.442695
      %v1908 = vpow.pop %v1907
      %v1909 = vmul.f32 %v1812, 1.442695
      %v1910 = vpow.pop %v1909
      %v1911 = vmul.f32 %v1813, 1.442695
      %v1912 = vpow.pop %v1911
      %v1913 = vmul.f32 %v1814, 1.442695
      %v1914 = vpow.pop %v1913
      %v1915 = vmul.f32 %v1815, 1.442695
      %v1916 = vpow.pop %v1915
      %v1917 = vmul.f32 %v1816, 1.442695
      %v1918 = vpow.pop %v1917
      %v1919 = vmul.f32 %v1817, 1.442695
      %v1920 = vpow.pop %v1919
      %v1921 = vmul.f32 %v1818, 1.442695
      %v1922 = vpow.pop %v1921
      %v1923 = vmul.f32 %v1819, 1.442695
      %v1924 = vpow.pop %v1923
      %v1925 = vmul.f32 %v1820, 1.442695
      %v1926 = vpow.pop %v1925
      %v1927 = vmul.f32 %v1821, 1.442695
      %v1928 = vpow.pop %v1927
      %v1929 = vmul.f32 %v1822, 1.442695
      %v1930 = vpow.pop %v1929
      %v1931 = vmul.f32 %v1823, 1.442695
      %v1932 = vpow.pop %v1931
      %v1933 = vmul.f32 %v1824, 1.442695
      %v1934 = vpow.pop %v1933
      %v1935 = vmul.f32 %v1825, 1.442695
      %v1936 = vpow.pop %v1935
      %v1937 = vmul.f32 %v1826, 1.442695
      %v1938 = vpow.pop %v1937
      %v1939 = vmul.f32 %v1827, 1.442695
      %v1940 = vpow.pop %v1939
      %v1941 = vmul.f32 %v1828, 1.442695
      %v1942 = vpow.pop %v1941
      %v1943 = vmul.f32 %v1829, 1.442695
      %v1944 = vpow.pop %v1943
      %v1945 = vmul.f32 %v1830, 1.442695
      %v1946 = vpow.pop %v1945
      %v1947 = vmul.f32 %v1831, 1.442695
      %v1948 = vpow.pop %v1947
      %v1949 = vmul.f32 %v1832, 1.442695
      %v1950 = vpow.pop %v1949
      %v1951 = vmul.f32 %v1833, 1.442695
      %v1952 = vpow.pop %v1951
      %v1953 = vmul.f32 %v1834, 1.442695
      %v1954 = vpow.pop %v1953
      %v1955 = vmul.f32 %v1835, 1.442695
      %v1956 = vpow.pop %v1955
      %v1957 = vmul.f32 %v1836, 1.442695
      %v1958 = vpow.pop %v1957
      %v1959 = vmul.f32 %v1837, 1.442695
      %v1960 = vpow.pop %v1959
      %v1961 = vmul.f32 %v1838, 1.442695
      %v1962 = vpow.pop %v1961
      %v1963 = vmul.f32 %v1839, 1.442695
      %v1964 = vpow.pop %v1963
      %v1965 = vmul.f32 %v1840, 1.442695
      %v1966 = vpow.pop %v1965
      %v1967 = vmul.f32 %v1841, 1.442695
      %v1968 = vpow.pop %v1967
      %v1969 = vmul.f32 %v1842, 1.442695
      %v1970 = vpow.pop %v1969
      %1971 = vadd.xlane.f32.xlu0 %v1844
      %v1972 = vpop.xlane.xlu0 %1971
      %1973 = vadd.xlane.f32.xlu0 %v1846
      %v1974 = vpop.xlane.xlu0 %1973
      %1975 = vadd.xlane.f32.xlu0 %v1848
      %v1976 = vpop.xlane.xlu0 %1975
      %1977 = vadd.xlane.f32.xlu0 %v1850
      %v1978 = vpop.xlane.xlu0 %1977
      %1979 = vadd.xlane.f32.xlu0 %v1852
      %v1980 = vpop.xlane.xlu0 %1979
      %1981 = vadd.xlane.f32.xlu0 %v1854
      %v1982 = vpop.xlane.xlu0 %1981
      %1983 = vadd.xlane.f32.xlu0 %v1856
      %v1984 = vpop.xlane.xlu0 %1983
      %1985 = vadd.xlane.f32.xlu0 %v1858
      %v1986 = vpop.xlane.xlu0 %1985
      %1987 = vadd.xlane.f32.xlu0 %v1860
      %v1988 = vpop.xlane.xlu0 %1987
      %1989 = vadd.xlane.f32.xlu0 %v1862
      %v1990 = vpop.xlane.xlu0 %1989
      %1991 = vadd.xlane.f32.xlu0 %v1864
      %v1992 = vpop.xlane.xlu0 %1991
      %1993 = vadd.xlane.f32.xlu0 %v1866
      %v1994 = vpop.xlane.xlu0 %1993
      %1995 = vadd.xlane.f32.xlu0 %v1868
      %v1996 = vpop.xlane.xlu0 %1995
      %1997 = vadd.xlane.f32.xlu0 %v1870
      %v1998 = vpop.xlane.xlu0 %1997
      %1999 = vadd.xlane.f32.xlu0 %v1872
      %v2000 = vpop.xlane.xlu0 %1999
      %2001 = vadd.xlane.f32.xlu0 %v1874
      %v2002 = vpop.xlane.xlu0 %2001
      %2003 = vadd.xlane.f32.xlu0 %v1876
      %v2004 = vpop.xlane.xlu0 %2003
      %2005 = vadd.xlane.f32.xlu0 %v1878
      %v2006 = vpop.xlane.xlu0 %2005
      %2007 = vadd.xlane.f32.xlu0 %v1880
      %v2008 = vpop.xlane.xlu0 %2007
      %2009 = vadd.xlane.f32.xlu0 %v1882
      %v2010 = vpop.xlane.xlu0 %2009
      %2011 = vadd.xlane.f32.xlu0 %v1884
      %v2012 = vpop.xlane.xlu0 %2011
      %2013 = vadd.xlane.f32.xlu0 %v1886
      %v2014 = vpop.xlane.xlu0 %2013
      %2015 = vadd.xlane.f32.xlu0 %v1888
      %v2016 = vpop.xlane.xlu0 %2015
      %2017 = vadd.xlane.f32.xlu0 %v1890
      %v2018 = vpop.xlane.xlu0 %2017
      %2019 = vadd.xlane.f32.xlu0 %v1892
      %v2020 = vpop.xlane.xlu0 %2019
      %2021 = vadd.xlane.f32.xlu0 %v1894
      %v2022 = vpop.xlane.xlu0 %2021
      %2023 = vadd.xlane.f32.xlu0 %v1896
      %v2024 = vpop.xlane.xlu0 %2023
      %2025 = vadd.xlane.f32.xlu0 %v1898
      %v2026 = vpop.xlane.xlu0 %2025
      %2027 = vadd.xlane.f32.xlu0 %v1900
      %v2028 = vpop.xlane.xlu0 %2027
      %2029 = vadd.xlane.f32.xlu0 %v1902
      %v2030 = vpop.xlane.xlu0 %2029
      %2031 = vadd.xlane.f32.xlu0 %v1904
      %v2032 = vpop.xlane.xlu0 %2031
      %2033 = vadd.xlane.f32.xlu0 %v1906
      %v2034 = vpop.xlane.xlu0 %2033
      %2035 = vadd.xlane.f32.xlu0 %v1908
      %v2036 = vpop.xlane.xlu0 %2035
      %2037 = vadd.xlane.f32.xlu0 %v1910
      %v2038 = vpop.xlane.xlu0 %2037
      %2039 = vadd.xlane.f32.xlu0 %v1912
      %v2040 = vpop.xlane.xlu0 %2039
      %2041 = vadd.xlane.f32.xlu0 %v1914
      %v2042 = vpop.xlane.xlu0 %2041
      %2043 = vadd.xlane.f32.xlu0 %v1916
      %v2044 = vpop.xlane.xlu0 %2043
      %2045 = vadd.xlane.f32.xlu0 %v1918
      %v2046 = vpop.xlane.xlu0 %2045
      %2047 = vadd.xlane.f32.xlu0 %v1920
      %v2048 = vpop.xlane.xlu0 %2047
      %2049 = vadd.xlane.f32.xlu0 %v1922
      %v2050 = vpop.xlane.xlu0 %2049
      %2051 = vadd.xlane.f32.xlu0 %v1924
      %v2052 = vpop.xlane.xlu0 %2051
      %2053 = vadd.xlane.f32.xlu0 %v1926
      %v2054 = vpop.xlane.xlu0 %2053
      %2055 = vadd.xlane.f32.xlu0 %v1928
      %v2056 = vpop.xlane.xlu0 %2055
      %2057 = vadd.xlane.f32.xlu0 %v1930
      %v2058 = vpop.xlane.xlu0 %2057
      %2059 = vadd.xlane.f32.xlu0 %v1932
      %v2060 = vpop.xlane.xlu0 %2059
      %2061 = vadd.xlane.f32.xlu0 %v1934
      %v2062 = vpop.xlane.xlu0 %2061
      %2063 = vadd.xlane.f32.xlu0 %v1936
      %v2064 = vpop.xlane.xlu0 %2063
      %2065 = vadd.xlane.f32.xlu0 %v1938
      %v2066 = vpop.xlane.xlu0 %2065
      %2067 = vadd.xlane.f32.xlu0 %v1940
      %v2068 = vpop.xlane.xlu0 %2067
      %2069 = vadd.xlane.f32.xlu0 %v1942
      %v2070 = vpop.xlane.xlu0 %2069
      %2071 = vadd.xlane.f32.xlu0 %v1944
      %v2072 = vpop.xlane.xlu0 %2071
      %2073 = vadd.xlane.f32.xlu0 %v1946
      %v2074 = vpop.xlane.xlu0 %2073
      %2075 = vadd.xlane.f32.xlu0 %v1948
      %v2076 = vpop.xlane.xlu0 %2075
      %2077 = vadd.xlane.f32.xlu0 %v1950
      %v2078 = vpop.xlane.xlu0 %2077
      %2079 = vadd.xlane.f32.xlu0 %v1952
      %v2080 = vpop.xlane.xlu0 %2079
      %2081 = vadd.xlane.f32.xlu0 %v1954
      %v2082 = vpop.xlane.xlu0 %2081
      %2083 = vadd.xlane.f32.xlu0 %v1956
      %v2084 = vpop.xlane.xlu0 %2083
      %2085 = vadd.xlane.f32.xlu0 %v1958
      %v2086 = vpop.xlane.xlu0 %2085
      %2087 = vadd.xlane.f32.xlu0 %v1960
      %v2088 = vpop.xlane.xlu0 %2087
      %2089 = vadd.xlane.f32.xlu0 %v1962
      %v2090 = vpop.xlane.xlu0 %2089
      %2091 = vadd.xlane.f32.xlu0 %v1964
      %v2092 = vpop.xlane.xlu0 %2091
      %2093 = vadd.xlane.f32.xlu0 %v1966
      %v2094 = vpop.xlane.xlu0 %2093
      %2095 = vadd.xlane.f32.xlu0 %v1968
      %v2096 = vpop.xlane.xlu0 %2095
      %2097 = vadd.xlane.f32.xlu0 %v1970
      %v2098 = vpop.xlane.xlu0 %2097
      %v2099 = vrcp.pop %v1972
      %v2100 = vrcp.pop %v1974
      %v2101 = vrcp.pop %v1976
      %v2102 = vrcp.pop %v1978
      %v2103 = vrcp.pop %v1980
      %v2104 = vrcp.pop %v1982
      %v2105 = vrcp.pop %v1984
      %v2106 = vrcp.pop %v1986
      %v2107 = vrcp.pop %v1988
      %v2108 = vrcp.pop %v1990
      %v2109 = vrcp.pop %v1992
      %v2110 = vrcp.pop %v1994
      %v2111 = vrcp.pop %v1996
      %v2112 = vrcp.pop %v1998
      %v2113 = vrcp.pop %v2000
      %v2114 = vrcp.pop %v2002
      %v2115 = vrcp.pop %v2004
      %v2116 = vrcp.pop %v2006
      %v2117 = vrcp.pop %v2008
      %v2118 = vrcp.pop %v2010
      %v2119 = vrcp.pop %v2012
      %v2120 = vrcp.pop %v2014
      %v2121 = vrcp.pop %v2016
      %v2122 = vrcp.pop %v2018
      %v2123 = vrcp.pop %v2020
      %v2124 = vrcp.pop %v2022
      %v2125 = vrcp.pop %v2024
      %v2126 = vrcp.pop %v2026
      %v2127 = vrcp.pop %v2028
      %v2128 = vrcp.pop %v2030
      %v2129 = vrcp.pop %v2032
      %v2130 = vrcp.pop %v2034
      %v2131 = vrcp.pop %v2036
      %v2132 = vrcp.pop %v2038
      %v2133 = vrcp.pop %v2040
      %v2134 = vrcp.pop %v2042
      %v2135 = vrcp.pop %v2044
      %v2136 = vrcp.pop %v2046
      %v2137 = vrcp.pop %v2048
      %v2138 = vrcp.pop %v2050
      %v2139 = vrcp.pop %v2052
      %v2140 = vrcp.pop %v2054
      %v2141 = vrcp.pop %v2056
      %v2142 = vrcp.pop %v2058
      %v2143 = vrcp.pop %v2060
      %v2144 = vrcp.pop %v2062
      %v2145 = vrcp.pop %v2064
      %v2146 = vrcp.pop %v2066
      %v2147 = vrcp.pop %v2068
      %v2148 = vrcp.pop %v2070
      %v2149 = vrcp.pop %v2072
      %v2150 = vrcp.pop %v2074
      %v2151 = vrcp.pop %v2076
      %v2152 = vrcp.pop %v2078
      %v2153 = vrcp.pop %v2080
      %v2154 = vrcp.pop %v2082
      %v2155 = vrcp.pop %v2084
      %v2156 = vrcp.pop %v2086
      %v2157 = vrcp.pop %v2088
      %v2158 = vrcp.pop %v2090
      %v2159 = vrcp.pop %v2092
      %v2160 = vrcp.pop %v2094
      %v2161 = vrcp.pop %v2096
      %v2162 = vrcp.pop %v2098
      %v2163 = vmul.f32 %v1844, %v2099
      %v2164 = vmul.f32 %v1846, %v2100
      %v2165 = vmul.f32 %v1848, %v2101
      %v2166 = vmul.f32 %v1850, %v2102
      %v2167 = vmul.f32 %v1852, %v2103
      %v2168 = vmul.f32 %v1854, %v2104
      %v2169 = vmul.f32 %v1856, %v2105
      %v2170 = vmul.f32 %v1858, %v2106
      %v2171 = vmul.f32 %v1860, %v2107
      %v2172 = vmul.f32 %v1862, %v2108
      %v2173 = vmul.f32 %v1864, %v2109
      %v2174 = vmul.f32 %v1866, %v2110
      %v2175 = vmul.f32 %v1868, %v2111
      %v2176 = vmul.f32 %v1870, %v2112
      %v2177 = vmul.f32 %v1872, %v2113
      %v2178 = vmul.f32 %v1874, %v2114
      %v2179 = vmul.f32 %v1876, %v2115
      %v2180 = vmul.f32 %v1878, %v2116
      %v2181 = vmul.f32 %v1880, %v2117
      %v2182 = vmul.f32 %v1882, %v2118
      %v2183 = vmul.f32 %v1884, %v2119
      %v2184 = vmul.f32 %v1886, %v2120
      %v2185 = vmul.f32 %v1888, %v2121
      %v2186 = vmul.f32 %v1890, %v2122
      %v2187 = vmul.f32 %v1892, %v2123
      %v2188 = vmul.f32 %v1894, %v2124
      %v2189 = vmul.f32 %v1896, %v2125
      %v2190 = vmul.f32 %v1898, %v2126
      %v2191 = vmul.f32 %v1900, %v2127
      %v2192 = vmul.f32 %v1902, %v2128
      %v2193 = vmul.f32 %v1904, %v2129
      %v2194 = vmul.f32 %v1906, %v2130
      %v2195 = vmul.f32 %v1908, %v2131
      %v2196 = vmul.f32 %v1910, %v2132
      %v2197 = vmul.f32 %v1912, %v2133
      %v2198 = vmul.f32 %v1914, %v2134
      %v2199 = vmul.f32 %v1916, %v2135
      %v2200 = vmul.f32 %v1918, %v2136
      %v2201 = vmul.f32 %v1920, %v2137
      %v2202 = vmul.f32 %v1922, %v2138
      %v2203 = vmul.f32 %v1924, %v2139
      %v2204 = vmul.f32 %v1926, %v2140
      %v2205 = vmul.f32 %v1928, %v2141
      %v2206 = vmul.f32 %v1930, %v2142
      %v2207 = vmul.f32 %v1932, %v2143
      %v2208 = vmul.f32 %v1934, %v2144
      %v2209 = vmul.f32 %v1936, %v2145
      %v2210 = vmul.f32 %v1938, %v2146
      %v2211 = vmul.f32 %v1940, %v2147
      %v2212 = vmul.f32 %v1942, %v2148
      %v2213 = vmul.f32 %v1944, %v2149
      %v2214 = vmul.f32 %v1946, %v2150
      %v2215 = vmul.f32 %v1948, %v2151
      %v2216 = vmul.f32 %v1950, %v2152
      %v2217 = vmul.f32 %v1952, %v2153
      %v2218 = vmul.f32 %v1954, %v2154
      %v2219 = vmul.f32 %v1956, %v2155
      %v2220 = vmul.f32 %v1958, %v2156
      %v2221 = vmul.f32 %v1960, %v2157
      %v2222 = vmul.f32 %v1962, %v2158
      %v2223 = vmul.f32 %v1964, %v2159
      %v2224 = vmul.f32 %v1966, %v2160
      %v2225 = vmul.f32 %v1968, %v2161
      %v2226 = vmul.f32 %v1970, %v2162
      %v2227 = vpack.c.bf16 %v2164, %v2163
      %v2228 = vpack.c.bf16 %v2166, %v2165
      %v2229 = vpack.c.bf16 %v2168, %v2167
      %v2230 = vpack.c.bf16 %v2170, %v2169
      %v2231 = vpack.c.bf16 %v2172, %v2171
      %v2232 = vpack.c.bf16 %v2174, %v2173
      %v2233 = vpack.c.bf16 %v2176, %v2175
      %v2234 = vpack.c.bf16 %v2178, %v2177
      %v2235 = vpack.c.bf16 %v2180, %v2179
      %v2236 = vpack.c.bf16 %v2182, %v2181
      %v2237 = vpack.c.bf16 %v2184, %v2183
      %v2238 = vpack.c.bf16 %v2186, %v2185
      %v2239 = vpack.c.bf16 %v2188, %v2187
      %v2240 = vpack.c.bf16 %v2190, %v2189
      %v2241 = vpack.c.bf16 %v2192, %v2191
      %v2242 = vpack.c.bf16 %v2194, %v2193
      %v2243 = vpack.c.bf16 %v2196, %v2195
      %v2244 = vpack.c.bf16 %v2198, %v2197
      %v2245 = vpack.c.bf16 %v2200, %v2199
      %v2246 = vpack.c.bf16 %v2202, %v2201
      %v2247 = vpack.c.bf16 %v2204, %v2203
      %v2248 = vpack.c.bf16 %v2206, %v2205
      %v2249 = vpack.c.bf16 %v2208, %v2207
      %v2250 = vpack.c.bf16 %v2210, %v2209
      %v2251 = vpack.c.bf16 %v2212, %v2211
      %v2252 = vpack.c.bf16 %v2214, %v2213
      %v2253 = vpack.c.bf16 %v2216, %v2215
      %v2254 = vpack.c.bf16 %v2218, %v2217
      %v2255 = vpack.c.bf16 %v2220, %v2219
      %v2256 = vpack.c.bf16 %v2222, %v2221
      %v2257 = vpack.c.bf16 %v2224, %v2223
      %v2258 = vpack.c.bf16 %v2226, %v2225
      %v2259 = vld [vmem:[%s334] sm:$0xf]
      %v2260 = vld [vmem:[%s334 + $0x4] sm:$0xf]
      %v2261 = vld [vmem:[%s334 + $0x8] sm:$0xf]
      %v2262 = vld [vmem:[%s334 + $0xc] sm:$0xf]
      %v2263 = vld [vmem:[%s334 + $0x10] sm:$0xf]
      %v2264 = vld [vmem:[%s334 + $0x14] sm:$0xf]
      %v2265 = vld [vmem:[%s334 + $0x18] sm:$0xf]
      %v2266 = vld [vmem:[%s334 + $0x1c] sm:$0xf]
      %v2267 = vld [vmem:[%s334 + $0x20] sm:$0xf]
      %v2268 = vld [vmem:[%s334 + $0x24] sm:$0xf]
      %v2269 = vld [vmem:[%s334 + $0x28] sm:$0xf]
      %v2270 = vld [vmem:[%s334 + $0x2c] sm:$0xf]
      %v2271 = vld [vmem:[%s334 + $0x30] sm:$0xf]
      %v2272 = vld [vmem:[%s334 + $0x34] sm:$0xf]
      %v2273 = vld [vmem:[%s334 + $0x38] sm:$0xf]
      %v2274 = vld [vmem:[%s334 + $0x3c] sm:$0xf]
      %v2275 = vld [vmem:[%s334 + $0x40] sm:$0xf]
      %v2276 = vld [vmem:[%s334 + $0x44] sm:$0xf]
      %v2277 = vld [vmem:[%s334 + $0x48] sm:$0xf]
      %v2278 = vld [vmem:[%s334 + $0x4c] sm:$0xf]
      %v2279 = vld [vmem:[%s334 + $0x50] sm:$0xf]
      %v2280 = vld [vmem:[%s334 + $0x54] sm:$0xf]
      %v2281 = vld [vmem:[%s334 + $0x58] sm:$0xf]
      %v2282 = vld [vmem:[%s334 + $0x5c] sm:$0xf]
      %v2283 = vld [vmem:[%s334 + $0x60] sm:$0xf]
      %v2284 = vld [vmem:[%s334 + $0x64] sm:$0xf]
      %v2285 = vld [vmem:[%s334 + $0x68] sm:$0xf]
      %v2286 = vld [vmem:[%s334 + $0x6c] sm:$0xf]
      %v2287 = vld [vmem:[%s334 + $0x70] sm:$0xf]
      %v2288 = vld [vmem:[%s334 + $0x74] sm:$0xf]
      %v2289 = vld [vmem:[%s334 + $0x78] sm:$0xf]
      %v2290 = vld [vmem:[%s334 + $0x7c] sm:$0xf]
      %v2291 = vld [vmem:[%s334 + $0x80] sm:$0xf]
      %v2292 = vld [vmem:[%s334 + $0x84] sm:$0xf]
      %v2293 = vld [vmem:[%s334 + $0x88] sm:$0xf]
      %v2294 = vld [vmem:[%s334 + $0x8c] sm:$0xf]
      %v2295 = vld [vmem:[%s334 + $0x90] sm:$0xf]
      %v2296 = vld [vmem:[%s334 + $0x94] sm:$0xf]
      %v2297 = vld [vmem:[%s334 + $0x98] sm:$0xf]
      %v2298 = vld [vmem:[%s334 + $0x9c] sm:$0xf]
      %v2299 = vld [vmem:[%s334 + $0xa0] sm:$0xf]
      %v2300 = vld [vmem:[%s334 + $0xa4] sm:$0xf]
      %v2301 = vld [vmem:[%s334 + $0xa8] sm:$0xf]
      %v2302 = vld [vmem:[%s334 + $0xac] sm:$0xf]
      %v2303 = vld [vmem:[%s334 + $0xb0] sm:$0xf]
      %v2304 = vld [vmem:[%s334 + $0xb4] sm:$0xf]
      %v2305 = vld [vmem:[%s334 + $0xb8] sm:$0xf]
      %v2306 = vld [vmem:[%s334 + $0xbc] sm:$0xf]
      %v2307 = vld [vmem:[%s334 + $0xc0] sm:$0xf]
      %v2308 = vld [vmem:[%s334 + $0xc4] sm:$0xf]
      %v2309 = vld [vmem:[%s334 + $0xc8] sm:$0xf]
      %v2310 = vld [vmem:[%s334 + $0xcc] sm:$0xf]
      %v2311 = vld [vmem:[%s334 + $0xd0] sm:$0xf]
      %v2312 = vld [vmem:[%s334 + $0xd4] sm:$0xf]
      %v2313 = vld [vmem:[%s334 + $0xd8] sm:$0xf]
      %v2314 = vld [vmem:[%s334 + $0xdc] sm:$0xf]
      %v2315 = vld [vmem:[%s334 + $0xe0] sm:$0xf]
      %v2316 = vld [vmem:[%s334 + $0xe4] sm:$0xf]
      %v2317 = vld [vmem:[%s334 + $0xe8] sm:$0xf]
      %v2318 = vld [vmem:[%s334 + $0xec] sm:$0xf]
      %v2319 = vld [vmem:[%s334 + $0xf0] sm:$0xf]
      %v2320 = vld [vmem:[%s334 + $0xf4] sm:$0xf]
      %v2321 = vld [vmem:[%s334 + $0xf8] sm:$0xf]
      %v2322 = vld [vmem:[%s334 + $0xfc] sm:$0xf]
      %v2339 = vunpack.c.l.b16 %v2259
      %v2340 = vunpack.c.l.b16 %v2260
      %v2341 = vunpack.c.l.b16 %v2261
      %v2342 = vunpack.c.l.b16 %v2262
      %v2343 = vunpack.c.l.b16 %v2263
      %v2344 = vunpack.c.l.b16 %v2264
      %v2345 = vunpack.c.l.b16 %v2265
      %v2346 = vunpack.c.l.b16 %v2266
      %v2347 = vunpack.c.l.b16 %v2267
      %v2348 = vunpack.c.l.b16 %v2268
      %v2349 = vunpack.c.l.b16 %v2269
      %v2350 = vunpack.c.l.b16 %v2270
      %v2351 = vunpack.c.l.b16 %v2271
      %v2352 = vunpack.c.l.b16 %v2272
      %v2353 = vunpack.c.l.b16 %v2273
      %v2354 = vunpack.c.l.b16 %v2274
      %v2355 = vpack.c.b16 %v2340, %v2339
      %v2356 = vpack.c.b16 %v2342, %v2341
      %v2357 = vpack.c.b16 %v2344, %v2343
      %v2358 = vpack.c.b16 %v2346, %v2345
      %v2359 = vpack.c.b16 %v2348, %v2347
      %v2360 = vpack.c.b16 %v2350, %v2349
      %v2361 = vpack.c.b16 %v2352, %v2351
      %v2362 = vpack.c.b16 %v2354, %v2353
      %2371 = vmatprep.subr.bf16.mxu0 0
      %2372 = vmatpush1.bf16.msra.mxu0 %v2355
      %2373 = vmatprep.subr.bf16.mxu0 0
      %2374 = vmatpush1.bf16.msra.mxu0 %v2356
      %2375 = vmatprep.subr.bf16.mxu0 0
      %2376 = vmatpush1.bf16.msra.mxu0 %v2357
      %2377 = vmatprep.subr.bf16.mxu0 0
      %2378 = vmatpush1.bf16.msra.mxu0 %v2358
      %2379 = vmatprep.subr.bf16.mxu0 0
      %2380 = vmatpush1.bf16.msra.mxu0 %v2359
      %2381 = vmatprep.subr.bf16.mxu0 0
      %2382 = vmatpush1.bf16.msra.mxu0 %v2360
      %2383 = vmatprep.subr.bf16.mxu0 0
      %2384 = vmatpush1.bf16.msra.mxu0 %v2361
      %2385 = vmatprep.subr.bf16.mxu0 0
      %2386 = vmatpush1.bf16.msra.mxu0 %v2362
      %2387 = vmatprep.subr.bf16.mxu0 0
      %2388 = vmatpush1.bf16.msra.mxu0 0
      %2389 = vmatprep.subr.bf16.mxu0 0
      %2390 = vmatpush1.bf16.msra.mxu0 0
      %2391 = vmatprep.subr.bf16.mxu0 0
      %2392 = vmatpush1.bf16.msra.mxu0 0
      %2393 = vmatprep.subr.bf16.mxu0 0
      %2394 = vmatpush1.bf16.msra.mxu0 0
      %2395 = vmatprep.subr.bf16.mxu0 0
      %2396 = vmatpush1.bf16.msra.mxu0 0
      %2397 = vmatprep.subr.bf16.mxu0 0
      %2398 = vmatpush1.bf16.msra.mxu0 0
      %2399 = vmatprep.subr.bf16.mxu0 0
      %2400 = vmatpush1.bf16.msra.mxu0 0
      %2401 = vmatprep.subr.bf16.mxu0 0
      %2402 = vmatpush1.bf16.msra.mxu0 0
      %2403 = vmatprep.mubr.bf16.mxu0 0
      %2404 = vmatmul.mubr.bf16.gmra.mrb[0].mxu0 %v2227
      %v2405 = vpop.f32.mrb[0].mxu0
      %v2406 = vadd.f32 0.0, %v2405
      %v2407 = vpop.f32.mrb[0].mxu0
      %v2408 = vpop.f32.mrb[0].mxu0
      %v2409 = vadd.f32 0.0, %v2408
      %v2410 = vpop.f32.mrb[0].mxu0
      %2411 = vmatprep.mubr.bf16.mxu0 0
      %2412 = vmatmul.mubr.bf16.gmra.mrb[0].mxu0 %v2228
      %v2413 = vpop.f32.mrb[0].mxu0
      %v2414 = vadd.f32 0.0, %v2413
      %v2415 = vpop.f32.mrb[0].mxu0
      %v2416 = vpop.f32.mrb[0].mxu0
      %v2417 = vadd.f32 0.0, %v2416
      %v2418 = vpop.f32.mrb[0].mxu0
      %2419 = vmatprep.mubr.bf16.mxu0 0
      %2420 = vmatmul.mubr.bf16.gmra.mrb[0].mxu0 %v2229
      %v2421 = vpop.f32.mrb[0].mxu0
      %v2422 = vadd.f32 0.0, %v2421
      %v2423 = vpop.f32.mrb[0].mxu0
      %v2424 = vpop.f32.mrb[0].mxu0
      %v2425 = vadd.f32 0.0, %v2424
      %v2426 = vpop.f32.mrb[0].mxu0
      %2427 = vmatprep.mubr.bf16.mxu0 0
      %2428 = vmatmul.mubr.bf16.gmra.mrb[0].mxu0 %v2230
      %v2429 = vpop.f32.mrb[0].mxu0
      %v2430 = vadd.f32 0.0, %v2429
      %v2431 = vpop.f32.mrb[0].mxu0
      %v2432 = vpop.f32.mrb[0].mxu0
      %v2433 = vadd.f32 0.0, %v2432
      %v2434 = vpop.f32.mrb[0].mxu0
      %2435 = vmatprep.mubr.bf16.mxu0 0
      %2436 = vmatmul.mubr.bf16.gmra.mrb[0].mxu0 %v2231
      %v2437 = vpop.f32.mrb[0].mxu0
      %v2438 = vadd.f32 0.0, %v2437
      %v2439 = vpop.f32.mrb[0].mxu0
      %v2440 = vpop.f32.mrb[0].mxu0
      %v2441 = vadd.f32 0.0, %v2440
      %v2442 = vpop.f32.mrb[0].mxu0
      %2443 = vmatprep.mubr.bf16.mxu0 0
      %2444 = vmatmul.mubr.bf16.gmra.mrb[0].mxu0 %v2232
      %v2445 = vpop.f32.mrb[0].mxu0
      %v2446 = vadd.f32 0.0, %v2445
      %v2447 = vpop.f32.mrb[0].mxu0
      %v2448 = vpop.f32.mrb[0].mxu0
      %v2449 = vadd.f32 0.0, %v2448
      %v2450 = vpop.f32.mrb[0].mxu0
      %2451 = vmatprep.mubr.bf16.mxu0 0
      %2452 = vmatmul.mubr.bf16.gmra.mrb[0].mxu0 %v2233
      %v2453 = vpop.f32.mrb[0].mxu0
      %v2454 = vadd.f32 0.0, %v2453
      %v2455 = vpop.f32.mrb[0].mxu0
      %v2456 = vpop.f32.mrb[0].mxu0
      %v2457 = vadd.f32 0.0, %v2456
      %v2458 = vpop.f32.mrb[0].mxu0
      %2459 = vmatprep.mubr.bf16.mxu0 0
      %2460 = vmatmul.mubr.bf16.gmra.mrb[0].mxu0 %v2234
      %v2461 = vpop.f32.mrb[0].mxu0
      %v2462 = vadd.f32 0.0, %v2461
      %v2463 = vpop.f32.mrb[0].mxu0
      %v2464 = vpop.f32.mrb[0].mxu0
      %v2465 = vadd.f32 0.0, %v2464
      %v2466 = vpop.f32.mrb[0].mxu0
      %2467 = vdwg.mxu0
      %v2484 = vunpack.c.l.b16 %v2275
      %v2485 = vunpack.c.l.b16 %v2276
      %v2486 = vunpack.c.l.b16 %v2277
      %v2487 = vunpack.c.l.b16 %v2278
      %v2488 = vunpack.c.l.b16 %v2279
      %v2489 = vunpack.c.l.b16 %v2280
      %v2490 = vunpack.c.l.b16 %v2281
      %v2491 = vunpack.c.l.b16 %v2282
      %v2492 = vunpack.c.l.b16 %v2283
      %v2493 = vunpack.c.l.b16 %v2284
      %v2494 = vunpack.c.l.b16 %v2285
      %v2495 = vunpack.c.l.b16 %v2286
      %v2496 = vunpack.c.l.b16 %v2287
      %v2497 = vunpack.c.l.b16 %v2288
      %v2498 = vunpack.c.l.b16 %v2289
      %v2499 = vunpack.c.l.b16 %v2290
      %v2500 = vpack.c.b16 %v2485, %v2484
      %v2501 = vpack.c.b16 %v2487, %v2486
      %v2502 = vpack.c.b16 %v2489, %v2488
      %v2503 = vpack.c.b16 %v2491, %v2490
      %v2504 = vpack.c.b16 %v2493, %v2492
      %v2505 = vpack.c.b16 %v2495, %v2494
      %v2506 = vpack.c.b16 %v2497, %v2496
      %v2507 = vpack.c.b16 %v2499, %v2498
      %2516 = vmatprep.subr.bf16.mxu0 0
      %2517 = vmatpush1.bf16.msra.mxu0 %v2500
      %2518 = vmatprep.subr.bf16.mxu0 0
      %2519 = vmatpush1.bf16.msra.mxu0 %v2501
      %2520 = vmatprep.subr.bf16.mxu0 0
      %2521 = vmatpush1.bf16.msra.mxu0 %v2502
      %2522 = vmatprep.subr.bf16.mxu0 0
      %2523 = vmatpush1.bf16.msra.mxu0 %v2503
      %2524 = vmatprep.subr.bf16.mxu0 0
      %2525 = vmatpush1.bf16.msra.mxu0 %v2504
      %2526 = vmatprep.subr.bf16.mxu0 0
      %2527 = vmatpush1.bf16.msra.mxu0 %v2505
      %2528 = vmatprep.subr.bf16.mxu0 0
      %2529 = vmatpush1.bf16.msra.mxu0 %v2506
      %2530 = vmatprep.subr.bf16.mxu0 0
      %2531 = vmatpush1.bf16.msra.mxu0 %v2507
      %2532 = vmatprep.subr.bf16.mxu0 0
      %2533 = vmatpush1.bf16.msra.mxu0 0
      %2534 = vmatprep.subr.bf16.mxu0 0
      %2535 = vmatpush1.bf16.msra.mxu0 0
      %2536 = vmatprep.subr.bf16.mxu0 0
      %2537 = vmatpush1.bf16.msra.mxu0 0
      %2538 = vmatprep.subr.bf16.mxu0 0
      %2539 = vmatpush1.bf16.msra.mxu0 0
      %2540 = vmatprep.subr.bf16.mxu0 0
      %2541 = vmatpush1.bf16.msra.mxu0 0
      %2542 = vmatprep.subr.bf16.mxu0 0
      %2543 = vmatpush1.bf16.msra.mxu0 0
      %2544 = vmatprep.subr.bf16.mxu0 0
      %2545 = vmatpush1.bf16.msra.mxu0 0
      %2546 = vmatprep.subr.bf16.mxu0 0
      %2547 = vmatpush1.bf16.msra.mxu0 0
      %2548 = vmatprep.mubr.bf16.mxu0 0
      %2549 = vmatmul.mubr.bf16.gmra.mrb[0].mxu0 %v2235
      %v2550 = vpop.f32.mrb[0].mxu0
      %v2551 = vadd.f32 0.0, %v2550
      %v2552 = vpop.f32.mrb[0].mxu0
      %v2553 = vpop.f32.mrb[0].mxu0
      %v2554 = vadd.f32 0.0, %v2553
      %v2555 = vpop.f32.mrb[0].mxu0
      %2556 = vmatprep.mubr.bf16.mxu0 0
      %2557 = vmatmul.mubr.bf16.gmra.mrb[0].mxu0 %v2236
      %v2558 = vpop.f32.mrb[0].mxu0
      %v2559 = vadd.f32 0.0, %v2558
      %v2560 = vpop.f32.mrb[0].mxu0
      %v2561 = vpop.f32.mrb[0].mxu0
      %v2562 = vadd.f32 0.0, %v2561
      %v2563 = vpop.f32.mrb[0].mxu0
      %2564 = vmatprep.mubr.bf16.mxu0 0
      %2565 = vmatmul.mubr.bf16.gmra.mrb[0].mxu0 %v2237
      %v2566 = vpop.f32.mrb[0].mxu0
      %v2567 = vadd.f32 0.0, %v2566
      %v2568 = vpop.f32.mrb[0].mxu0
      %v2569 = vpop.f32.mrb[0].mxu0
      %v2570 = vadd.f32 0.0, %v2569
      %v2571 = vpop.f32.mrb[0].mxu0
      %2572 = vmatprep.mubr.bf16.mxu0 0
      %2573 = vmatmul.mubr.bf16.gmra.mrb[0].mxu0 %v2238
      %v2574 = vpop.f32.mrb[0].mxu0
      %v2575 = vadd.f32 0.0, %v2574
      %v2576 = vpop.f32.mrb[0].mxu0
      %v2577 = vpop.f32.mrb[0].mxu0
      %v2578 = vadd.f32 0.0, %v2577
      %v2579 = vpop.f32.mrb[0].mxu0
      %2580 = vmatprep.mubr.bf16.mxu0 0
      %2581 = vmatmul.mubr.bf16.gmra.mrb[0].mxu0 %v2239
      %v2582 = vpop.f32.mrb[0].mxu0
      %v2583 = vadd.f32 0.0, %v2582
      %v2584 = vpop.f32.mrb[0].mxu0
      %v2585 = vpop.f32.mrb[0].mxu0
      %v2586 = vadd.f32 0.0, %v2585
      %v2587 = vpop.f32.mrb[0].mxu0
      %2588 = vmatprep.mubr.bf16.mxu0 0
      %2589 = vmatmul.mubr.bf16.gmra.mrb[0].mxu0 %v2240
      %v2590 = vpop.f32.mrb[0].mxu0
      %v2591 = vadd.f32 0.0, %v2590
      %v2592 = vpop.f32.mrb[0].mxu0
      %v2593 = vpop.f32.mrb[0].mxu0
      %v2594 = vadd.f32 0.0, %v2593
      %v2595 = vpop.f32.mrb[0].mxu0
      %2596 = vmatprep.mubr.bf16.mxu0 0
      %2597 = vmatmul.mubr.bf16.gmra.mrb[0].mxu0 %v2241
      %v2598 = vpop.f32.mrb[0].mxu0
      %v2599 = vadd.f32 0.0, %v2598
      %v2600 = vpop.f32.mrb[0].mxu0
      %v2601 = vpop.f32.mrb[0].mxu0
      %v2602 = vadd.f32 0.0, %v2601
      %v2603 = vpop.f32.mrb[0].mxu0
      %2604 = vmatprep.mubr.bf16.mxu0 0
      %2605 = vmatmul.mubr.bf16.gmra.mrb[0].mxu0 %v2242
      %v2606 = vpop.f32.mrb[0].mxu0
      %v2607 = vadd.f32 0.0, %v2606
      %v2608 = vpop.f32.mrb[0].mxu0
      %v2609 = vpop.f32.mrb[0].mxu0
      %v2610 = vadd.f32 0.0, %v2609
      %v2611 = vpop.f32.mrb[0].mxu0
      %2612 = vdwg.mxu0
      %v2629 = vunpack.c.l.b16 %v2291
      %v2630 = vunpack.c.l.b16 %v2292
      %v2631 = vunpack.c.l.b16 %v2293
      %v2632 = vunpack.c.l.b16 %v2294
      %v2633 = vunpack.c.l.b16 %v2295
      %v2634 = vunpack.c.l.b16 %v2296
      %v2635 = vunpack.c.l.b16 %v2297
      %v2636 = vunpack.c.l.b16 %v2298
      %v2637 = vunpack.c.l.b16 %v2299
      %v2638 = vunpack.c.l.b16 %v2300
      %v2639 = vunpack.c.l.b16 %v2301
      %v2640 = vunpack.c.l.b16 %v2302
      %v2641 = vunpack.c.l.b16 %v2303
      %v2642 = vunpack.c.l.b16 %v2304
      %v2643 = vunpack.c.l.b16 %v2305
      %v2644 = vunpack.c.l.b16 %v2306
      %v2645 = vpack.c.b16 %v2630, %v2629
      %v2646 = vpack.c.b16 %v2632, %v2631
      %v2647 = vpack.c.b16 %v2634, %v2633
      %v2648 = vpack.c.b16 %v2636, %v2635
      %v2649 = vpack.c.b16 %v2638, %v2637
      %v2650 = vpack.c.b16 %v2640, %v2639
      %v2651 = vpack.c.b16 %v2642, %v2641
      %v2652 = vpack.c.b16 %v2644, %v2643
      %2661 = vmatprep.subr.bf16.mxu0 0
      %2662 = vmatpush1.bf16.msra.mxu0 %v2645
      %2663 = vmatprep.subr.bf16.mxu0 0
      %2664 = vmatpush1.bf16.msra.mxu0 %v2646
      %2665 = vmatprep.subr.bf16.mxu0 0
      %2666 = vmatpush1.bf16.msra.mxu0 %v2647
      %2667 = vmatprep.subr.bf16.mxu0 0
      %2668 = vmatpush1.bf16.msra.mxu0 %v2648
      %2669 = vmatprep.subr.bf16.mxu0 0
      %2670 = vmatpush1.bf16.msra.mxu0 %v2649
      %2671 = vmatprep.subr.bf16.mxu0 0
      %2672 = vmatpush1.bf16.msra.mxu0 %v2650
      %2673 = vmatprep.subr.bf16.mxu0 0
      %2674 = vmatpush1.bf16.msra.mxu0 %v2651
      %2675 = vmatprep.subr.bf16.mxu0 0
      %2676 = vmatpush1.bf16.msra.mxu0 %v2652
      %2677 = vmatprep.subr.bf16.mxu0 0
      %2678 = vmatpush1.bf16.msra.mxu0 0
      %2679 = vmatprep.subr.bf16.mxu0 0
      %2680 = vmatpush1.bf16.msra.mxu0 0
      %2681 = vmatprep.subr.bf16.mxu0 0
      %2682 = vmatpush1.bf16.msra.mxu0 0
      %2683 = vmatprep.subr.bf16.mxu0 0
      %2684 = vmatpush1.bf16.msra.mxu0 0
      %2685 = vmatprep.subr.bf16.mxu0 0
      %2686 = vmatpush1.bf16.msra.mxu0 0
      %2687 = vmatprep.subr.bf16.mxu0 0
      %2688 = vmatpush1.bf16.msra.mxu0 0
      %2689 = vmatprep.subr.bf16.mxu0 0
      %2690 = vmatpush1.bf16.msra.mxu0 0
      %2691 = vmatprep.subr.bf16.mxu0 0
      %2692 = vmatpush1.bf16.msra.mxu0 0
      %2693 = vmatprep.mubr.bf16.mxu0 0
      %2694 = vmatmul.mubr.bf16.gmra.mrb[0].mxu0 %v2243
      %v2695 = vpop.f32.mrb[0].mxu0
      %v2696 = vadd.f32 0.0, %v2695
      %v2697 = vpop.f32.mrb[0].mxu0
      %v2698 = vpop.f32.mrb[0].mxu0
      %v2699 = vadd.f32 0.0, %v2698
      %v2700 = vpop.f32.mrb[0].mxu0
      %2701 = vmatprep.mubr.bf16.mxu0 0
      %2702 = vmatmul.mubr.bf16.gmra.mrb[0].mxu0 %v2244
      %v2703 = vpop.f32.mrb[0].mxu0
      %v2704 = vadd.f32 0.0, %v2703
      %v2705 = vpop.f32.mrb[0].mxu0
      %v2706 = vpop.f32.mrb[0].mxu0
      %v2707 = vadd.f32 0.0, %v2706
      %v2708 = vpop.f32.mrb[0].mxu0
      %2709 = vmatprep.mubr.bf16.mxu0 0
      %2710 = vmatmul.mubr.bf16.gmra.mrb[0].mxu0 %v2245
      %v2711 = vpop.f32.mrb[0].mxu0
      %v2712 = vadd.f32 0.0, %v2711
      %v2713 = vpop.f32.mrb[0].mxu0
      %v2714 = vpop.f32.mrb[0].mxu0
      %v2715 = vadd.f32 0.0, %v2714
      %v2716 = vpop.f32.mrb[0].mxu0
      %2717 = vmatprep.mubr.bf16.mxu0 0
      %2718 = vmatmul.mubr.bf16.gmra.mrb[0].mxu0 %v2246
      %v2719 = vpop.f32.mrb[0].mxu0
      %v2720 = vadd.f32 0.0, %v2719
      %v2721 = vpop.f32.mrb[0].mxu0
      %v2722 = vpop.f32.mrb[0].mxu0
      %v2723 = vadd.f32 0.0, %v2722
      %v2724 = vpop.f32.mrb[0].mxu0
      %2725 = vmatprep.mubr.bf16.mxu0 0
      %2726 = vmatmul.mubr.bf16.gmra.mrb[0].mxu0 %v2247
      %v2727 = vpop.f32.mrb[0].mxu0
      %v2728 = vadd.f32 0.0, %v2727
      %v2729 = vpop.f32.mrb[0].mxu0
      %v2730 = vpop.f32.mrb[0].mxu0
      %v2731 = vadd.f32 0.0, %v2730
      %v2732 = vpop.f32.mrb[0].mxu0
      %2733 = vmatprep.mubr.bf16.mxu0 0
      %2734 = vmatmul.mubr.bf16.gmra.mrb[0].mxu0 %v2248
      %v2735 = vpop.f32.mrb[0].mxu0
      %v2736 = vadd.f32 0.0, %v2735
      %v2737 = vpop.f32.mrb[0].mxu0
      %v2738 = vpop.f32.mrb[0].mxu0
      %v2739 = vadd.f32 0.0, %v2738
      %v2740 = vpop.f32.mrb[0].mxu0
      %2741 = vmatprep.mubr.bf16.mxu0 0
      %2742 = vmatmul.mubr.bf16.gmra.mrb[0].mxu0 %v2249
      %v2743 = vpop.f32.mrb[0].mxu0
      %v2744 = vadd.f32 0.0, %v2743
      %v2745 = vpop.f32.mrb[0].mxu0
      %v2746 = vpop.f32.mrb[0].mxu0
      %v2747 = vadd.f32 0.0, %v2746
      %v2748 = vpop.f32.mrb[0].mxu0
      %2749 = vmatprep.mubr.bf16.mxu0 0
      %2750 = vmatmul.mubr.bf16.gmra.mrb[0].mxu0 %v2250
      %v2751 = vpop.f32.mrb[0].mxu0
      %v2752 = vadd.f32 0.0, %v2751
      %v2753 = vpop.f32.mrb[0].mxu0
      %v2754 = vpop.f32.mrb[0].mxu0
      %v2755 = vadd.f32 0.0, %v2754
      %v2756 = vpop.f32.mrb[0].mxu0
      %2757 = vdwg.mxu0
      %v2774 = vunpack.c.l.b16 %v2307
      %v2775 = vunpack.c.l.b16 %v2308
      %v2776 = vunpack.c.l.b16 %v2309
      %v2777 = vunpack.c.l.b16 %v2310
      %v2778 = vunpack.c.l.b16 %v2311
      %v2779 = vunpack.c.l.b16 %v2312
      %v2780 = vunpack.c.l.b16 %v2313
      %v2781 = vunpack.c.l.b16 %v2314
      %v2782 = vunpack.c.l.b16 %v2315
      %v2783 = vunpack.c.l.b16 %v2316
      %v2784 = vunpack.c.l.b16 %v2317
      %v2785 = vunpack.c.l.b16 %v2318
      %v2786 = vunpack.c.l.b16 %v2319
      %v2787 = vunpack.c.l.b16 %v2320
      %v2788 = vunpack.c.l.b16 %v2321
      %v2789 = vunpack.c.l.b16 %v2322
      %v2790 = vpack.c.b16 %v2775, %v2774
      %v2791 = vpack.c.b16 %v2777, %v2776
      %v2792 = vpack.c.b16 %v2779, %v2778
      %v2793 = vpack.c.b16 %v2781, %v2780
      %v2794 = vpack.c.b16 %v2783, %v2782
      %v2795 = vpack.c.b16 %v2785, %v2784
      %v2796 = vpack.c.b16 %v2787, %v2786
      %v2797 = vpack.c.b16 %v2789, %v2788
      %2806 = vmatprep.subr.bf16.mxu0 0
      %2807 = vmatpush1.bf16.msra.mxu0 %v2790
      %2808 = vmatprep.subr.bf16.mxu0 0
      %2809 = vmatpush1.bf16.msra.mxu0 %v2791
      %2810 = vmatprep.subr.bf16.mxu0 0
      %2811 = vmatpush1.bf16.msra.mxu0 %v2792
      %2812 = vmatprep.subr.bf16.mxu0 0
      %2813 = vmatpush1.bf16.msra.mxu0 %v2793
      %2814 = vmatprep.subr.bf16.mxu0 0
      %2815 = vmatpush1.bf16.msra.mxu0 %v2794
      %2816 = vmatprep.subr.bf16.mxu0 0
      %2817 = vmatpush1.bf16.msra.mxu0 %v2795
      %2818 = vmatprep.subr.bf16.mxu0 0
      %2819 = vmatpush1.bf16.msra.mxu0 %v2796
      %2820 = vmatprep.subr.bf16.mxu0 0
      %2821 = vmatpush1.bf16.msra.mxu0 %v2797
      %2822 = vmatprep.subr.bf16.mxu0 0
      %2823 = vmatpush1.bf16.msra.mxu0 0
      %2824 = vmatprep.subr.bf16.mxu0 0
      %2825 = vmatpush1.bf16.msra.mxu0 0
      %2826 = vmatprep.subr.bf16.mxu0 0
      %2827 = vmatpush1.bf16.msra.mxu0 0
      %2828 = vmatprep.subr.bf16.mxu0 0
      %2829 = vmatpush1.bf16.msra.mxu0 0
      %2830 = vmatprep.subr.bf16.mxu0 0
      %2831 = vmatpush1.bf16.msra.mxu0 0
      %2832 = vmatprep.subr.bf16.mxu0 0
      %2833 = vmatpush1.bf16.msra.mxu0 0
      %2834 = vmatprep.subr.bf16.mxu0 0
      %2835 = vmatpush1.bf16.msra.mxu0 0
      %2836 = vmatprep.subr.bf16.mxu0 0
      %2837 = vmatpush1.bf16.msra.mxu0 0
      %2838 = vmatprep.mubr.bf16.mxu0 0
      %2839 = vmatmul.mubr.bf16.gmra.mrb[0].mxu0 %v2251
      %v2840 = vpop.f32.mrb[0].mxu0
      %v2841 = vadd.f32 0.0, %v2840
      %v2842 = vpop.f32.mrb[0].mxu0
      %v2843 = vpop.f32.mrb[0].mxu0
      %v2844 = vadd.f32 0.0, %v2843
      %v2845 = vpop.f32.mrb[0].mxu0
      %2846 = vmatprep.mubr.bf16.mxu0 0
      %2847 = vmatmul.mubr.bf16.gmra.mrb[0].mxu0 %v2252
      %v2848 = vpop.f32.mrb[0].mxu0
      %v2849 = vadd.f32 0.0, %v2848
      %v2850 = vpop.f32.mrb[0].mxu0
      %v2851 = vpop.f32.mrb[0].mxu0
      %v2852 = vadd.f32 0.0, %v2851
      %v2853 = vpop.f32.mrb[0].mxu0
      %2854 = vmatprep.mubr.bf16.mxu0 0
      %2855 = vmatmul.mubr.bf16.gmra.mrb[0].mxu0 %v2253
      %v2856 = vpop.f32.mrb[0].mxu0
      %v2857 = vadd.f32 0.0, %v2856
      %v2858 = vpop.f32.mrb[0].mxu0
      %v2859 = vpop.f32.mrb[0].mxu0
      %v2860 = vadd.f32 0.0, %v2859
      %v2861 = vpop.f32.mrb[0].mxu0
      %2862 = vmatprep.mubr.bf16.mxu0 0
      %2863 = vmatmul.mubr.bf16.gmra.mrb[0].mxu0 %v2254
      %v2864 = vpop.f32.mrb[0].mxu0
      %v2865 = vadd.f32 0.0, %v2864
      %v2866 = vpop.f32.mrb[0].mxu0
      %v2867 = vpop.f32.mrb[0].mxu0
      %v2868 = vadd.f32 0.0, %v2867
      %v2869 = vpop.f32.mrb[0].mxu0
      %2870 = vmatprep.mubr.bf16.mxu0 0
      %2871 = vmatmul.mubr.bf16.gmra.mrb[0].mxu0 %v2255
      %v2872 = vpop.f32.mrb[0].mxu0
      %v2873 = vadd.f32 0.0, %v2872
      %v2874 = vpop.f32.mrb[0].mxu0
      %v2875 = vpop.f32.mrb[0].mxu0
      %v2876 = vadd.f32 0.0, %v2875
      %v2877 = vpop.f32.mrb[0].mxu0
      %2878 = vmatprep.mubr.bf16.mxu0 0
      %2879 = vmatmul.mubr.bf16.gmra.mrb[0].mxu0 %v2256
      %v2880 = vpop.f32.mrb[0].mxu0
      %v2881 = vadd.f32 0.0, %v2880
      %v2882 = vpop.f32.mrb[0].mxu0
      %v2883 = vpop.f32.mrb[0].mxu0
      %v2884 = vadd.f32 0.0, %v2883
      %v2885 = vpop.f32.mrb[0].mxu0
      %2886 = vmatprep.mubr.bf16.mxu0 0
      %2887 = vmatmul.mubr.bf16.gmra.mrb[0].mxu0 %v2257
      %v2888 = vpop.f32.mrb[0].mxu0
      %v2889 = vadd.f32 0.0, %v2888
      %v2890 = vpop.f32.mrb[0].mxu0
      %v2891 = vpop.f32.mrb[0].mxu0
      %v2892 = vadd.f32 0.0, %v2891
      %v2893 = vpop.f32.mrb[0].mxu0
      %2894 = vmatprep.mubr.bf16.mxu0 0
      %2895 = vmatmul.mubr.bf16.gmra.mrb[0].mxu0 %v2258
      %v2896 = vpop.f32.mrb[0].mxu0
      %v2897 = vadd.f32 0.0, %v2896
      %v2898 = vpop.f32.mrb[0].mxu0
      %v2899 = vpop.f32.mrb[0].mxu0
      %v2900 = vadd.f32 0.0, %v2899
      %v2901 = vpop.f32.mrb[0].mxu0
      %2902 = vdwg.mxu0
      %2903 = vst.msk [vmem:[%s348] sm:$0xff] %vm558, %v2406
      %2904 = vst.msk [vmem:[%s348 + $0x8] sm:$0xff] %vm558, %v2409
      %2905 = vst.msk [vmem:[%s348 + $0x10] sm:$0xff] %vm558, %v2414
      %2906 = vst.msk [vmem:[%s348 + $0x18] sm:$0xff] %vm558, %v2417
      %2907 = vst.msk [vmem:[%s348 + $0x20] sm:$0xff] %vm558, %v2422
      %2908 = vst.msk [vmem:[%s348 + $0x28] sm:$0xff] %vm558, %v2425
      %2909 = vst.msk [vmem:[%s348 + $0x30] sm:$0xff] %vm558, %v2430
      %2910 = vst.msk [vmem:[%s348 + $0x38] sm:$0xff] %vm558, %v2433
      %2911 = vst.msk [vmem:[%s348 + $0x40] sm:$0xff] %vm558, %v2438
      %2912 = vst.msk [vmem:[%s348 + $0x48] sm:$0xff] %vm558, %v2441
      %2913 = vst.msk [vmem:[%s348 + $0x50] sm:$0xff] %vm558, %v2446
      %2914 = vst.msk [vmem:[%s348 + $0x58] sm:$0xff] %vm558, %v2449
      %2915 = vst.msk [vmem:[%s348 + $0x60] sm:$0xff] %vm558, %v2454
      %2916 = vst.msk [vmem:[%s348 + $0x68] sm:$0xff] %vm558, %v2457
      %2917 = vst.msk [vmem:[%s348 + $0x70] sm:$0xff] %vm558, %v2462
      %2918 = vst.msk [vmem:[%s348 + $0x78] sm:$0xff] %vm558, %v2465
      %2919 = vst.msk [vmem:[%s348 + $0x80] sm:$0xff] %vm558, %v2551
      %2920 = vst.msk [vmem:[%s348 + $0x88] sm:$0xff] %vm558, %v2554
      %2921 = vst.msk [vmem:[%s348 + $0x90] sm:$0xff] %vm558, %v2559
      %2922 = vst.msk [vmem:[%s348 + $0x98] sm:$0xff] %vm558, %v2562
      %2923 = vst.msk [vmem:[%s348 + $0xa0] sm:$0xff] %vm558, %v2567
      %2924 = vst.msk [vmem:[%s348 + $0xa8] sm:$0xff] %vm558, %v2570
      %2925 = vst.msk [vmem:[%s348 + $0xb0] sm:$0xff] %vm558, %v2575
      %2926 = vst.msk [vmem:[%s348 + $0xb8] sm:$0xff] %vm558, %v2578
      %2927 = vst.msk [vmem:[%s348 + $0xc0] sm:$0xff] %vm558, %v2583
      %2928 = vst.msk [vmem:[%s348 + $0xc8] sm:$0xff] %vm558, %v2586
      %2929 = vst.msk [vmem:[%s348 + $0xd0] sm:$0xff] %vm558, %v2591
      %2930 = vst.msk [vmem:[%s348 + $0xd8] sm:$0xff] %vm558, %v2594
      %2931 = vst.msk [vmem:[%s348 + $0xe0] sm:$0xff] %vm558, %v2599
      %2932 = vst.msk [vmem:[%s348 + $0xe8] sm:$0xff] %vm558, %v2602
      %2933 = vst.msk [vmem:[%s348 + $0xf0] sm:$0xff] %vm558, %v2607
      %2934 = vst.msk [vmem:[%s348 + $0xf8] sm:$0xff] %vm558, %v2610
      %2935 = vst.msk [vmem:[%s348 + $0x100] sm:$0xff] %vm558, %v2696
      %2936 = vst.msk [vmem:[%s348 + $0x108] sm:$0xff] %vm558, %v2699
      %2937 = vst.msk [vmem:[%s348 + $0x110] sm:$0xff] %vm558, %v2704
      %2938 = vst.msk [vmem:[%s348 + $0x118] sm:$0xff] %vm558, %v2707
      %2939 = vst.msk [vmem:[%s348 + $0x120] sm:$0xff] %vm558, %v2712
      %2940 = vst.msk [vmem:[%s348 + $0x128] sm:$0xff] %vm558, %v2715
      %2941 = vst.msk [vmem:[%s348 + $0x130] sm:$0xff] %vm558, %v2720
      %2942 = vst.msk [vmem:[%s348 + $0x138] sm:$0xff] %vm558, %v2723
      %2943 = vst.msk [vmem:[%s348 + $0x140] sm:$0xff] %vm558, %v2728
      %2944 = vst.msk [vmem:[%s348 + $0x148] sm:$0xff] %vm558, %v2731
      %2945 = vst.msk [vmem:[%s348 + $0x150] sm:$0xff] %vm558, %v2736
      %2946 = vst.msk [vmem:[%s348 + $0x158] sm:$0xff] %vm558, %v2739
      %2947 = vst.msk [vmem:[%s348 + $0x160] sm:$0xff] %vm558, %v2744
      %2948 = vst.msk [vmem:[%s348 + $0x168] sm:$0xff] %vm558, %v2747
      %2949 = vst.msk [vmem:[%s348 + $0x170] sm:$0xff] %vm558, %v2752
      %2950 = vst.msk [vmem:[%s348 + $0x178] sm:$0xff] %vm558, %v2755
      %2951 = vst.msk [vmem:[%s348 + $0x180] sm:$0xff] %vm558, %v2841
      %2952 = vst.msk [vmem:[%s348 + $0x188] sm:$0xff] %vm558, %v2844
      %2953 = vst.msk [vmem:[%s348 + $0x190] sm:$0xff] %vm558, %v2849
      %2954 = vst.msk [vmem:[%s348 + $0x198] sm:$0xff] %vm558, %v2852
      %2955 = vst.msk [vmem:[%s348 + $0x1a0] sm:$0xff] %vm558, %v2857
      %2956 = vst.msk [vmem:[%s348 + $0x1a8] sm:$0xff] %vm558, %v2860
      %2957 = vst.msk [vmem:[%s348 + $0x1b0] sm:$0xff] %vm558, %v2865
      %2958 = vst.msk [vmem:[%s348 + $0x1b8] sm:$0xff] %vm558, %v2868
      %2959 = vst.msk [vmem:[%s348 + $0x1c0] sm:$0xff] %vm558, %v2873
      %2960 = vst.msk [vmem:[%s348 + $0x1c8] sm:$0xff] %vm558, %v2876
      %2961 = vst.msk [vmem:[%s348 + $0x1d0] sm:$0xff] %vm558, %v2881
      %2962 = vst.msk [vmem:[%s348 + $0x1d8] sm:$0xff] %vm558, %v2884
      %2963 = vst.msk [vmem:[%s348 + $0x1e0] sm:$0xff] %vm558, %v2889
      %2964 = vst.msk [vmem:[%s348 + $0x1e8] sm:$0xff] %vm558, %v2892
      %2965 = vst.msk [vmem:[%s348 + $0x1f0] sm:$0xff] %vm558, %v2897
      %2966 = vst.msk [vmem:[%s348 + $0x1f8] sm:$0xff] %vm558, %v2900
      %p2967 = scmp.lt.s32.totalorder %s20, 1
      %s2968 = scalar_select %p2967, %s20, 1
      %p2969 = scmp.lt.s32.totalorder %s21, 5
      %s2970 = scalar_select %p2969, %s21, 5
      %s2971 = smul.addr %s2970, 64
      %s2972 = smul.addr %s2968, 384
      %s2973 = sadd.s32 %s2971, %s2972
      %s2974 = smul.addr %s2973, 8
      %s2975 = scalar_lea.vmem %s5, %s2974
      // Predicated region
      $region41: #{variable_shape_attention.1} parent=39 // pred_check
        %p2976 = pneg %p179
      $region42: #{variable_shape_attention.1} parent=39 // pred_check_branch
        %2978 = sbr.rel (%p2976) target = $region44
      $region43: #{variable_shape_attention.1} parent=39 // pred_region
        _
      $region44: #{variable_shape_attention.1} parent=39 // pred_fallthru
        _
    $region40: #{variable_shape_attention.1} parent=5 // pred_fallthru
      _
    %p2979 = scmp.le.s32.totalorder 2, %s11
    // Predicated region
    $region45: #{variable_shape_attention.1} parent=5 // pred_check
      %p2980 = pneg %p2979
    $region46: #{variable_shape_attention.1} parent=5 // pred_check_branch
      %2982 = sbr.rel (%p2980) target = $region48
    $region47: #{variable_shape_attention.1} parent=5 // pred_region
      %s2983 = ssub.s32 %s11, 2
      // Predicated region
      $region49: #{variable_shape_attention.1} parent=47 // pred_check
        %p2984 = pneg %p185
      $region50: #{variable_shape_attention.1} parent=47 // pred_check_branch
        %2986 = sbr.rel (%p2984) target = $region52
      $region51: #{variable_shape_attention.1} parent=47 // pred_region
        %p2987 = scmp.lt.s32.totalorder %s22, 1
        %s2988 = scalar_select %p2987, %s22, 1
        %p2989 = scmp.lt.s32.totalorder %s23, 5
        %s2990 = scalar_select %p2989, %s23, 5
        %s2991 = smul.addr %s2990, 64
        %s2992 = smul.addr %s2988, 384
        %s2993 = sadd.s32 %s2991, %s2992
        %s2994 = smul.addr %s2993, 8
        %s2995 = scalar_lea.vmem %s5, %s2994
      $region52: #{variable_shape_attention.1} parent=47 // pred_fallthru
        _
    $region48: #{variable_shape_attention.1} parent=5 // pred_fallthru
      _
  $region6: #{variable_shape_attention.1} parent=0 // loop_footer
    %s15 = sadd.s32 1, %s11
  $region7: #{variable_shape_attention.1} parent=0 // loop_footer_branch
    %10 = sbr.rel target = $region3
  $region8: #{variable_shape_attention.1} parent=0 // loop_exit
    _

</llo_original>
